<compile_context>
chip_gen: v5e
topology: v5e:2x2
jax: 0.10.0
libtpu: 0.0.40
codegen_flags: <defaults>
</compile_context>

<pallas_src>
import functools

import jax
import jax.numpy as jnp
from jax import lax
from jax.experimental import pallas as pl
from jax.experimental.pallas import tpu as pltpu


# ----------------------------- Pallas kernel --------------------------------

def _zero_block_kernel(x_ref, w1_ref, b1_ref, w2_ref, b2_ref,
                       wl1_ref, bl1_ref, wl2w_ref, bl2w_ref, wl2b_ref, bl2b_ref,
                       o_ref, pad_ref, patch_ref, *, height, width):
    """Fused ZeroResidualBlock forward for one sample.

    x_ref    : (1, C, HW)    activation, compute dtype (f32 or bf16)
    w{1,2}   : (C, 9C)       merged 3x3 conv weights, compute dtype
    b{1,2}   : (C, 1)        conv biases, f32
    wl1      : (HID, C) f32  linear1 weight          bl1    : (HID, 1) f32
    wl2w/b   : (C, HID) f32  linear2 weight halves   bl2w/b : (C, 1)   f32
    o_ref    : (1, C, HW)    output, f32
    pad_ref  : (C, HW+2W+2)  VMEM scratch: zero-padded flat activation
    patch_ref: (9C, HW)      VMEM scratch: im2col patches (VMEM only)
    """
    c = o_ref.shape[1]
    hw = height * width
    cdt = pad_ref.dtype

    # column index of every output pixel -> masks for left/right taps
    col = lax.broadcasted_iota(jnp.int32, (1, hw), 1) % width
    keep_l = col >= 1            # tap dx == 0 valid only when col-1 >= 0
    keep_r = col <= width - 2    # tap dx == 2 valid only when col+1 <  W

    # zero once per invocation; the two (W+1)-wide pad strips are never
    # overwritten, the interior is fully rewritten before each conv.
    pad_ref[...] = jnp.zeros_like(pad_ref)

    def conv3x3(h, w_ref, b_ref):
        # h: (C, HW) in compute dtype. 3x3 same-padding conv as a single
        # (C, 9C) x (9C, HW) matmul; taps are lane-shifted slices of the
        # zero-padded flat activation held in VMEM (no im2col in HBM).
        pad_ref[:, width + 1: width + 1 + hw] = h
        for dy in range(3):
            for dx in range(3):
                t = pad_ref[:, dy * width + dx: dy * width + dx + hw]
                if dx == 0:
                    t = jnp.where(keep_l, t, jnp.zeros_like(t))
                elif dx == 2:
                    t = jnp.where(keep_r, t, jnp.zeros_like(t))
                patch_ref[(dy * 3 + dx) * c: (dy * 3 + dx + 1) * c, :] = t
        acc = jnp.dot(w_ref[...], patch_ref[...],
                      preferred_element_type=jnp.float32)        # (C, HW) f32
        return acc + b_ref[...]

    x = x_ref[0]                                                 # (C, HW) cdt
    h1 = jnp.maximum(conv3x3(x, w1_ref, b1_ref), 0.0)            # relu(conv1)
    conv_out = conv3x3(h1.astype(cdt), w2_ref, b2_ref)           # conv2, f32

    # AdaptiveAvgPool2d(1): mean over the spatial (lane) axis -> (C, 1)
    pooled = jnp.mean(conv_out, axis=1, keepdims=True)

    # gate MLP: linear1 -> relu -> linear2 (split into the W / B halves)
    y = jnp.dot(wl1_ref[...], pooled,
                preferred_element_type=jnp.float32) + bl1_ref[...]   # (HID, 1)
    y = jnp.maximum(y, 0.0)
    w_gate = jax.nn.sigmoid(
        jnp.dot(wl2w_ref[...], y, preferred_element_type=jnp.float32)
        + bl2w_ref[...])                                             # (C, 1)
    b_gate = (jnp.dot(wl2b_ref[...], y, preferred_element_type=jnp.float32)
              + bl2b_ref[...])                                       # (C, 1)

    out = x.astype(jnp.float32) + w_gate * conv_out + b_gate
    o_ref[0] = jnp.maximum(out, 0.0).astype(o_ref.dtype)


# ------------------------------ JAX wrapper ----------------------------------

def zero_residual_block(x_nchw, params, *, compute_dtype=jnp.float32):
    """Pallas ZeroResidualBlock.forward.  NCHW in / NCHW out (PyTorch layouts)."""
    w1, b1, w2, b2, wl1, bl1, wl2, bl2 = params
    n, c, h, w = x_nchw.shape
    hw = h * w
    hwp = hw + 2 * w + 2                  # flat length incl. zero padding
    hidden = wl1.shape[0]

    # free reshape: NCHW -> (N, C, HW); HW sits on the lane axis everywhere.
    x_flat = x_nchw.reshape(n, c, hw).astype(compute_dtype)

    # torch conv weight (O, I, 3, 3) -> merged (O, 9*I); row t*I+i of the
    # patch matrix holds tap t = dy*3+dx of input channel i.
    def merge_taps(wt):
        return jnp.transpose(wt, (0, 2, 3, 1)).reshape(c, 9 * c).astype(compute_dtype)

    w1_m, w2_m = merge_taps(w1), merge_taps(w2)
    b1_c = b1.reshape(c, 1).astype(jnp.float32)
    b2_c = b2.reshape(c, 1).astype(jnp.float32)
    wl1_m = wl1.astype(jnp.float32)                       # (HID, C)
    bl1_c = bl1.reshape(hidden, 1).astype(jnp.float32)
    wl2_w = wl2[:c].astype(jnp.float32)                   # (C, HID) -> gate W
    wl2_b = wl2[c:].astype(jnp.float32)                   # (C, HID) -> gate B
    bl2_w = bl2[:c].reshape(c, 1).astype(jnp.float32)
    bl2_b = bl2[c:].reshape(c, 1).astype(jnp.float32)

    kernel = functools.partial(_zero_block_kernel, height=h, width=w)

    out_flat = pl.pallas_call(
        kernel,
        out_shape=jax.ShapeDtypeStruct((n, c, hw), jnp.float32),
        grid=(n,),
        in_specs=[
            pl.BlockSpec((1, c, hw), lambda i: (i, 0, 0)),      # x
            pl.BlockSpec((c, 9 * c), lambda i: (0, 0)),         # w1 merged
            pl.BlockSpec((c, 1), lambda i: (0, 0)),             # b1
            pl.BlockSpec((c, 9 * c), lambda i: (0, 0)),         # w2 merged
            pl.BlockSpec((c, 1), lambda i: (0, 0)),             # b2
            pl.BlockSpec((hidden, c), lambda i: (0, 0)),        # wl1
            pl.BlockSpec((hidden, 1), lambda i: (0, 0)),        # bl1
            pl.BlockSpec((c, hidden), lambda i: (0, 0)),        # wl2 (W half)
            pl.BlockSpec((c, 1), lambda i: (0, 0)),             # bl2 (W half)
            pl.BlockSpec((c, hidden), lambda i: (0, 0)),        # wl2 (B half)
            pl.BlockSpec((c, 1), lambda i: (0, 0)),             # bl2 (B half)
        ],
        out_specs=pl.BlockSpec((1, c, hw), lambda i: (i, 0, 0)),
        scratch_shapes=[
            pltpu.VMEM((c, hwp), compute_dtype),      # zero-padded activation
            pltpu.VMEM((9 * c, hw), compute_dtype),   # im2col patches
        ],
        compiler_params=pltpu.CompilerParams(
            dimension_semantics=("parallel",),
            vmem_limit_bytes=32 * 1024 * 1024),
    )(x_flat, w1_m, b1_c, w2_m, b2_c,
      wl1_m, bl1_c, wl2_w, bl2_w, wl2_b, bl2_b)

    return out_flat.reshape(n, c, h, w)


# --------------------------- pure-JAX reference ------------------------------

def ref_forward(x_nchw, params):
    w1, b1, w2, b2, wl1, bl1, wl2, bl2 = params
    c = x_nchw.shape[1]

    def conv(x, wt, b):
        y = lax.conv_general_dilated(x, wt, (1, 1), 'SAME',
                                     dimension_numbers=('NCHW', 'OIHW', 'NCHW'))
        return y + b[None, :, None, None]

    out = jax.nn.relu(conv(x_nchw, w1, b1))
    out = conv(out, w2, b2)
    y = out.mean(axis=(2, 3))
    y = jax.nn.relu(y @ wl1.T + bl1)
    y = y @ wl2.T + bl2
    wg = jax.nn.sigmoid(y[:, :c])[:, :, None, None]
    bg = y[:, c:][:, :, None, None]
    return jax.nn.relu(x_nchw + wg * out + bg)


# --------------------------------- main --------------------------------------

if __name__ == "__main__":
    key = jax.random.PRNGKey(0)
    filters, batch, height, width = 4, 2, 16, 16
    keys = jax.random.split(key, 9)

    x = jax.random.normal(keys[0], (batch, filters, height, width), jnp.float32)
    # deterministic synthetic parameters (shapes match nn.Module __init__)
    w1 = 0.1 * jax.random.normal(keys[1], (filters, filters, 3, 3), jnp.float32)
    b1 = 0.1 * jax.random.normal(keys[2], (filters,), jnp.float32)
    w2 = 0.1 * jax.random.normal(keys[3], (filters, filters, 3, 3), jnp.float32)
    b2 = 0.1 * jax.random.normal(keys[4], (filters,), jnp.float32)
    wl1 = 0.1 * jax.random.normal(keys[5], (32, filters), jnp.float32)
    bl1 = 0.1 * jax.random.normal(keys[6], (32,), jnp.float32)
    wl2 = 0.1 * jax.random.normal(keys[7], (2 * filters, 32), jnp.float32)
    bl2 = 0.1 * jax.random.normal(keys[8], (2 * filters,), jnp.float32)
    params = (w1, b1, w2, b2, wl1, bl1, wl2, bl2)

    ref = ref_forward(x, params)

    # f32 path: exact semantics of the PyTorch module
    out_f32 = jax.block_until_ready(zero_residual_block(x, params))
    assert out_f32.shape == ref.shape == (batch, filters, height, width)
    err_f32 = float(jnp.max(jnp.abs(out_f32 - ref)))
    if err_f32 > 1e-4:
        raise SystemExit(f"f32 mismatch: max abs err {err_f32:e}")

    # bf16 transfer/matmul path (f32 accumulation) — halves HBM/VMEM traffic
    out_bf16 = jax.block_until_ready(
        zero_residual_block(x, params, compute_dtype=jnp.bfloat16))
    err_bf16 = float(jnp.max(jnp.abs(out_bf16 - ref)))
    if err_bf16 > 1e-1:
        raise SystemExit(f"bf16 mismatch: max abs err {err_bf16:e}")

    print("KERNEL_OK")
</pallas_src>

<mosaic_0001>
module attributes {stable_mosaic.version = 11 : i64} {
  func.func @_zero_block_kernel(%arg0: i32, %arg1: memref<1x4x256xf32, #tpu.memory_space<vmem>>, %arg2: memref<4x36xf32, #tpu.memory_space<vmem>>, %arg3: memref<4x1xf32, #tpu.memory_space<vmem>>, %arg4: memref<4x36xf32, #tpu.memory_space<vmem>>, %arg5: memref<4x1xf32, #tpu.memory_space<vmem>>, %arg6: memref<32x4xf32, #tpu.memory_space<vmem>>, %arg7: memref<32x1xf32, #tpu.memory_space<vmem>>, %arg8: memref<4x32xf32, #tpu.memory_space<vmem>>, %arg9: memref<4x1xf32, #tpu.memory_space<vmem>>, %arg10: memref<4x32xf32, #tpu.memory_space<vmem>>, %arg11: memref<4x1xf32, #tpu.memory_space<vmem>>, %arg12: memref<1x4x256xf32, #tpu.memory_space<vmem>>, %arg13: memref<4x290xf32, #tpu.memory_space<vmem>>, %arg14: memref<36x256xf32, #tpu.memory_space<vmem>>) attributes {dimension_semantics = [#tpu.dimension_semantics<parallel>], iteration_bounds = array<i64: 2>, scalar_prefetch = 0 : i64, scratch_operands = 2 : i64, tpu.core_type = #tpu.core_type<tc>, window_params = [{transform_indices = @transform_0, window_bounds = array<i64: 1, 4, 256>}, {pipeline_mode = #tpu.pipeline_mode<synchronous>, transform_indices = @transform_1, window_bounds = array<i64: 4, 36>}, {pipeline_mode = #tpu.pipeline_mode<synchronous>, transform_indices = @transform_2, window_bounds = array<i64: 4, 1>}, {pipeline_mode = #tpu.pipeline_mode<synchronous>, transform_indices = @transform_3, window_bounds = array<i64: 4, 36>}, {pipeline_mode = #tpu.pipeline_mode<synchronous>, transform_indices = @transform_4, window_bounds = array<i64: 4, 1>}, {pipeline_mode = #tpu.pipeline_mode<synchronous>, transform_indices = @transform_5, window_bounds = array<i64: 32, 4>}, {pipeline_mode = #tpu.pipeline_mode<synchronous>, transform_indices = @transform_6, window_bounds = array<i64: 32, 1>}, {pipeline_mode = #tpu.pipeline_mode<synchronous>, transform_indices = @transform_7, window_bounds = array<i64: 4, 32>}, {pipeline_mode = #tpu.pipeline_mode<synchronous>, transform_indices = @transform_8, window_bounds = array<i64: 4, 1>}, {pipeline_mode = #tpu.pipeline_mode<synchronous>, transform_indices = @transform_9, window_bounds = array<i64: 4, 32>}, {pipeline_mode = #tpu.pipeline_mode<synchronous>, transform_indices = @transform_10, window_bounds = array<i64: 4, 1>}, {transform_indices = @transform_11, window_bounds = array<i64: 1, 4, 256>}]} {
    %0 = tpu.iota {dimensions = array<i32: 1>} : vector<1x256xi32>
    %c16_i32 = arith.constant 16 : i32
    %c0_i32 = arith.constant 0 : i32
    %1 = arith.cmpi eq, %c16_i32, %c0_i32 : i32
    %c1_i32 = arith.constant 1 : i32
    %2 = arith.select %1, %c1_i32, %c16_i32 : i32
    %3 = vector.broadcast %2 : i32 to vector<1x256xi32>
    %4 = arith.remsi %0, %3 : vector<1x256xi32>
    %c0_i32_0 = arith.constant 0 : i32
    %5 = vector.broadcast %c0_i32_0 : i32 to vector<1x256xi32>
    %6 = arith.cmpi ne, %4, %5 : vector<1x256xi32>
    %c0_i32_1 = arith.constant 0 : i32
    %7 = vector.broadcast %c0_i32_1 : i32 to vector<1x256xi32>
    %8 = arith.cmpi slt, %4, %7 : vector<1x256xi32>
    %c0_i32_2 = arith.constant 0 : i32
    %9 = arith.cmpi slt, %2, %c0_i32_2 : i32
    %10 = vector.broadcast %9 : i1 to vector<1x256xi1>
    %11 = vector.broadcast %10 : vector<1x256xi1> to vector<1x256xi1>
    %12 = arith.xori %8, %11 : vector<1x256xi1>
    %13 = arith.andi %12, %6 : vector<1x256xi1>
    %14 = vector.broadcast %2 : i32 to vector<1x256xi32>
    %15 = arith.addi %4, %14 : vector<1x256xi32>
    %16 = arith.select %13, %15, %4 : vector<1x256xi1>, vector<1x256xi32>
    %c1_i32_3 = arith.constant 1 : i32
    %17 = vector.broadcast %c1_i32_3 : i32 to vector<1x256xi32>
    %18 = arith.cmpi sge, %16, %17 : vector<1x256xi32>
    %c14_i32 = arith.constant 14 : i32
    %19 = vector.broadcast %c14_i32 : i32 to vector<1x256xi32>
    %20 = arith.cmpi sle, %16, %19 : vector<1x256xi32>
    %cst = arith.constant 0.000000e+00 : f32
    %21 = vector.broadcast %cst : f32 to vector<4x290xf32>
    %c0 = arith.constant 0 : index
    %c0_4 = arith.constant 0 : index
    %22 = vector.load %arg13[%c0, %c0_4] : memref<4x290xf32, #tpu.memory_space<vmem>>, vector<4x290xf32>
    tpu.vector_store %arg13[%c0, %c0_4], %21 {strides = array<i32>} : memref<4x290xf32, #tpu.memory_space<vmem>>, vector<4x290xf32>,
    %c0_5 = arith.constant 0 : index
    %c0_6 = arith.constant 0 : index
    %c0_7 = arith.constant 0 : index
    %23 = vector.load %arg1[%c0_5, %c0_6, %c0_7] : memref<1x4x256xf32, #tpu.memory_space<vmem>>, vector<1x4x256xf32>
    %24 = vector.shape_cast %23 : vector<1x4x256xf32> to vector<4x256xf32>
    %c0_8 = arith.constant 0 : index
    %c17 = arith.constant 17 : index
    %25 = vector.load %arg13[%c0_8, %c17] : memref<4x290xf32, #tpu.memory_space<vmem>>, vector<4x256xf32>
    tpu.vector_store %arg13[%c0_8, %c17], %24 {strides = array<i32>} : memref<4x290xf32, #tpu.memory_space<vmem>>, vector<4x256xf32>,
    %c0_9 = arith.constant 0 : index
    %c0_10 = arith.constant 0 : index
    %26 = vector.load %arg13[%c0_9, %c0_10] : memref<4x290xf32, #tpu.memory_space<vmem>>, vector<4x256xf32>
    %cst_11 = arith.constant 0.000000e+00 : f32
    %27 = vector.broadcast %cst_11 : f32 to vector<4x256xf32>
    %28 = vector.shape_cast %18 : vector<1x256xi1> to vector<1x256xi1>
    %29 = vector.broadcast %28 : vector<1x256xi1> to vector<4x256xi1>
    %30 = arith.select %29, %26, %27 : vector<4x256xi1>, vector<4x256xf32>
    %c0_12 = arith.constant 0 : index
    %c0_13 = arith.constant 0 : index
    %31 = vector.load %arg14[%c0_12, %c0_13] : memref<36x256xf32, #tpu.memory_space<vmem>>, vector<4x256xf32>
    tpu.vector_store %arg14[%c0_12, %c0_13], %30 {strides = array<i32>} : memref<36x256xf32, #tpu.memory_space<vmem>>, vector<4x256xf32>,
    %c0_14 = arith.constant 0 : index
    %c1 = arith.constant 1 : index
    %32 = vector.load %arg13[%c0_14, %c1] : memref<4x290xf32, #tpu.memory_space<vmem>>, vector<4x256xf32>
    %c4 = arith.constant 4 : index
    %c0_15 = arith.constant 0 : index
    %33 = vector.load %arg14[%c4, %c0_15] : memref<36x256xf32, #tpu.memory_space<vmem>>, vector<4x256xf32>
    tpu.vector_store %arg14[%c4, %c0_15], %32 {strides = array<i32>} : memref<36x256xf32, #tpu.memory_space<vmem>>, vector<4x256xf32>,
    %c0_16 = arith.constant 0 : index
    %c2 = arith.constant 2 : index
    %34 = vector.load %arg13[%c0_16, %c2] : memref<4x290xf32, #tpu.memory_space<vmem>>, vector<4x256xf32>
    %cst_17 = arith.constant 0.000000e+00 : f32
    %35 = vector.broadcast %cst_17 : f32 to vector<4x256xf32>
    %36 = vector.shape_cast %20 : vector<1x256xi1> to vector<1x256xi1>
    %37 = vector.broadcast %36 : vector<1x256xi1> to vector<4x256xi1>
    %38 = arith.select %37, %34, %35 : vector<4x256xi1>, vector<4x256xf32>
    %c8 = arith.constant 8 : index
    %c0_18 = arith.constant 0 : index
    %39 = vector.load %arg14[%c8, %c0_18] : memref<36x256xf32, #tpu.memory_space<vmem>>, vector<4x256xf32>
    tpu.vector_store %arg14[%c8, %c0_18], %38 {strides = array<i32>} : memref<36x256xf32, #tpu.memory_space<vmem>>, vector<4x256xf32>,
    %c0_19 = arith.constant 0 : index
    %c16 = arith.constant 16 : index
    %40 = vector.load %arg13[%c0_19, %c16] : memref<4x290xf32, #tpu.memory_space<vmem>>, vector<4x256xf32>
    %cst_20 = arith.constant 0.000000e+00 : f32
    %41 = vector.broadcast %cst_20 : f32 to vector<4x256xf32>
    %42 = vector.shape_cast %18 : vector<1x256xi1> to vector<1x256xi1>
    %43 = vector.broadcast %42 : vector<1x256xi1> to vector<4x256xi1>
    %44 = arith.select %43, %40, %41 : vector<4x256xi1>, vector<4x256xf32>
    %c12 = arith.constant 12 : index
    %c0_21 = arith.constant 0 : index
    %45 = vector.load %arg14[%c12, %c0_21] : memref<36x256xf32, #tpu.memory_space<vmem>>, vector<4x256xf32>
    tpu.vector_store %arg14[%c12, %c0_21], %44 {strides = array<i32>} : memref<36x256xf32, #tpu.memory_space<vmem>>, vector<4x256xf32>,
    %c0_22 = arith.constant 0 : index
    %c17_23 = arith.constant 17 : index
    %46 = vector.load %arg13[%c0_22, %c17_23] : memref<4x290xf32, #tpu.memory_space<vmem>>, vector<4x256xf32>
    %c16_24 = arith.constant 16 : index
    %c0_25 = arith.constant 0 : index
    %47 = vector.load %arg14[%c16_24, %c0_25] : memref<36x256xf32, #tpu.memory_space<vmem>>, vector<4x256xf32>
    tpu.vector_store %arg14[%c16_24, %c0_25], %46 {strides = array<i32>} : memref<36x256xf32, #tpu.memory_space<vmem>>, vector<4x256xf32>,
    %c0_26 = arith.constant 0 : index
    %c18 = arith.constant 18 : index
    %48 = vector.load %arg13[%c0_26, %c18] : memref<4x290xf32, #tpu.memory_space<vmem>>, vector<4x256xf32>
    %cst_27 = arith.constant 0.000000e+00 : f32
    %49 = vector.broadcast %cst_27 : f32 to vector<4x256xf32>
    %50 = vector.shape_cast %20 : vector<1x256xi1> to vector<1x256xi1>
    %51 = vector.broadcast %50 : vector<1x256xi1> to vector<4x256xi1>
    %52 = arith.select %51, %48, %49 : vector<4x256xi1>, vector<4x256xf32>
    %c20 = arith.constant 20 : index
    %c0_28 = arith.constant 0 : index
    %53 = vector.load %arg14[%c20, %c0_28] : memref<36x256xf32, #tpu.memory_space<vmem>>, vector<4x256xf32>
    tpu.vector_store %arg14[%c20, %c0_28], %52 {strides = array<i32>} : memref<36x256xf32, #tpu.memory_space<vmem>>, vector<4x256xf32>,
    %c0_29 = arith.constant 0 : index
    %c32 = arith.constant 32 : index
    %54 = vector.load %arg13[%c0_29, %c32] : memref<4x290xf32, #tpu.memory_space<vmem>>, vector<4x256xf32>
    %cst_30 = arith.constant 0.000000e+00 : f32
    %55 = vector.broadcast %cst_30 : f32 to vector<4x256xf32>
    %56 = vector.shape_cast %18 : vector<1x256xi1> to vector<1x256xi1>
    %57 = vector.broadcast %56 : vector<1x256xi1> to vector<4x256xi1>
    %58 = arith.select %57, %54, %55 : vector<4x256xi1>, vector<4x256xf32>
    %c24 = arith.constant 24 : index
    %c0_31 = arith.constant 0 : index
    %59 = vector.load %arg14[%c24, %c0_31] : memref<36x256xf32, #tpu.memory_space<vmem>>, vector<4x256xf32>
    tpu.vector_store %arg14[%c24, %c0_31], %58 {strides = array<i32>} : memref<36x256xf32, #tpu.memory_space<vmem>>, vector<4x256xf32>,
    %c0_32 = arith.constant 0 : index
    %c33 = arith.constant 33 : index
    %60 = vector.load %arg13[%c0_32, %c33] : memref<4x290xf32, #tpu.memory_space<vmem>>, vector<4x256xf32>
    %c28 = arith.constant 28 : index
    %c0_33 = arith.constant 0 : index
    %61 = vector.load %arg14[%c28, %c0_33] : memref<36x256xf32, #tpu.memory_space<vmem>>, vector<4x256xf32>
    tpu.vector_store %arg14[%c28, %c0_33], %60 {strides = array<i32>} : memref<36x256xf32, #tpu.memory_space<vmem>>, vector<4x256xf32>,
    %c0_34 = arith.constant 0 : index
    %c34 = arith.constant 34 : index
    %62 = vector.load %arg13[%c0_34, %c34] : memref<4x290xf32, #tpu.memory_space<vmem>>, vector<4x256xf32>
    %cst_35 = arith.constant 0.000000e+00 : f32
    %63 = vector.broadcast %cst_35 : f32 to vector<4x256xf32>
    %64 = vector.shape_cast %20 : vector<1x256xi1> to vector<1x256xi1>
    %65 = vector.broadcast %64 : vector<1x256xi1> to vector<4x256xi1>
    %66 = arith.select %65, %62, %63 : vector<4x256xi1>, vector<4x256xf32>
    %c32_36 = arith.constant 32 : index
    %c0_37 = arith.constant 0 : index
    %67 = vector.load %arg14[%c32_36, %c0_37] : memref<36x256xf32, #tpu.memory_space<vmem>>, vector<4x256xf32>
    tpu.vector_store %arg14[%c32_36, %c0_37], %66 {strides = array<i32>} : memref<36x256xf32, #tpu.memory_space<vmem>>, vector<4x256xf32>,
    %c0_38 = arith.constant 0 : index
    %c0_39 = arith.constant 0 : index
    %68 = vector.load %arg2[%c0_38, %c0_39] : memref<4x36xf32, #tpu.memory_space<vmem>>, vector<4x36xf32>
    %c0_40 = arith.constant 0 : index
    %c0_41 = arith.constant 0 : index
    %69 = vector.load %arg14[%c0_40, %c0_41] : memref<36x256xf32, #tpu.memory_space<vmem>>, vector<36x256xf32>
    %cst_42 = arith.constant dense<0.000000e+00> : vector<4x256xf32>
    %70 = tpu.matmul %68, %69, %cst_42 {dimension_numbers = #tpu.dot_dimension_numbers<[1], [0], [0], [1], [0, 0, 1, 1], [], []>} : vector<4x36xf32>, vector<36x256xf32>, vector<4x256xf32> -> vector<4x256xf32>
    %c0_43 = arith.constant 0 : index
    %c0_44 = arith.constant 0 : index
    %71 = vector.load %arg3[%c0_43, %c0_44] : memref<4x1xf32, #tpu.memory_space<vmem>>, vector<4x1xf32>
    %72 = vector.broadcast %71 : vector<4x1xf32> to vector<4x256xf32>
    %73 = arith.addf %70, %72 : vector<4x256xf32>
    %cst_45 = arith.constant 0.000000e+00 : f32
    %74 = vector.broadcast %cst_45 : f32 to vector<4x256xf32>
    %75 = arith.maximumf %73, %74 : vector<4x256xf32>
    %c0_46 = arith.constant 0 : index
    %c17_47 = arith.constant 17 : index
    %76 = vector.load %arg13[%c0_46, %c17_47] : memref<4x290xf32, #tpu.memory_space<vmem>>, vector<4x256xf32>
    tpu.vector_store %arg13[%c0_46, %c17_47], %75 {strides = array<i32>} : memref<4x290xf32, #tpu.memory_space<vmem>>, vector<4x256xf32>,
    %c0_48 = arith.constant 0 : index
    %c0_49 = arith.constant 0 : index
    %77 = vector.load %arg13[%c0_48, %c0_49] : memref<4x290xf32, #tpu.memory_space<vmem>>, vector<4x256xf32>
    %cst_50 = arith.constant 0.000000e+00 : f32
    %78 = vector.broadcast %cst_50 : f32 to vector<4x256xf32>
    %79 = vector.shape_cast %18 : vector<1x256xi1> to vector<1x256xi1>
    %80 = vector.broadcast %79 : vector<1x256xi1> to vector<4x256xi1>
    %81 = arith.select %80, %77, %78 : vector<4x256xi1>, vector<4x256xf32>
    %c0_51 = arith.constant 0 : index
    %c0_52 = arith.constant 0 : index
    %82 = vector.load %arg14[%c0_51, %c0_52] : memref<36x256xf32, #tpu.memory_space<vmem>>, vector<4x256xf32>
    tpu.vector_store %arg14[%c0_51, %c0_52], %81 {strides = array<i32>} : memref<36x256xf32, #tpu.memory_space<vmem>>, vector<4x256xf32>,
    %c0_53 = arith.constant 0 : index
    %c1_54 = arith.constant 1 : index
    %83 = vector.load %arg13[%c0_53, %c1_54] : memref<4x290xf32, #tpu.memory_space<vmem>>, vector<4x256xf32>
    %c4_55 = arith.constant 4 : index
    %c0_56 = arith.constant 0 : index
    %84 = vector.load %arg14[%c4_55, %c0_56] : memref<36x256xf32, #tpu.memory_space<vmem>>, vector<4x256xf32>
    tpu.vector_store %arg14[%c4_55, %c0_56], %83 {strides = array<i32>} : memref<36x256xf32, #tpu.memory_space<vmem>>, vector<4x256xf32>,
    %c0_57 = arith.constant 0 : index
    %c2_58 = arith.constant 2 : index
    %85 = vector.load %arg13[%c0_57, %c2_58] : memref<4x290xf32, #tpu.memory_space<vmem>>, vector<4x256xf32>
    %cst_59 = arith.constant 0.000000e+00 : f32
    %86 = vector.broadcast %cst_59 : f32 to vector<4x256xf32>
    %87 = vector.shape_cast %20 : vector<1x256xi1> to vector<1x256xi1>
    %88 = vector.broadcast %87 : vector<1x256xi1> to vector<4x256xi1>
    %89 = arith.select %88, %85, %86 : vector<4x256xi1>, vector<4x256xf32>
    %c8_60 = arith.constant 8 : index
    %c0_61 = arith.constant 0 : index
    %90 = vector.load %arg14[%c8_60, %c0_61] : memref<36x256xf32, #tpu.memory_space<vmem>>, vector<4x256xf32>
    tpu.vector_store %arg14[%c8_60, %c0_61], %89 {strides = array<i32>} : memref<36x256xf32, #tpu.memory_space<vmem>>, vector<4x256xf32>,
    %c0_62 = arith.constant 0 : index
    %c16_63 = arith.constant 16 : index
    %91 = vector.load %arg13[%c0_62, %c16_63] : memref<4x290xf32, #tpu.memory_space<vmem>>, vector<4x256xf32>
    %cst_64 = arith.constant 0.000000e+00 : f32
    %92 = vector.broadcast %cst_64 : f32 to vector<4x256xf32>
    %93 = vector.shape_cast %18 : vector<1x256xi1> to vector<1x256xi1>
    %94 = vector.broadcast %93 : vector<1x256xi1> to vector<4x256xi1>
    %95 = arith.select %94, %91, %92 : vector<4x256xi1>, vector<4x256xf32>
    %c12_65 = arith.constant 12 : index
    %c0_66 = arith.constant 0 : index
    %96 = vector.load %arg14[%c12_65, %c0_66] : memref<36x256xf32, #tpu.memory_space<vmem>>, vector<4x256xf32>
    tpu.vector_store %arg14[%c12_65, %c0_66], %95 {strides = array<i32>} : memref<36x256xf32, #tpu.memory_space<vmem>>, vector<4x256xf32>,
    %c0_67 = arith.constant 0 : index
    %c17_68 = arith.constant 17 : index
    %97 = vector.load %arg13[%c0_67, %c17_68] : memref<4x290xf32, #tpu.memory_space<vmem>>, vector<4x256xf32>
    %c16_69 = arith.constant 16 : index
    %c0_70 = arith.constant 0 : index
    %98 = vector.load %arg14[%c16_69, %c0_70] : memref<36x256xf32, #tpu.memory_space<vmem>>, vector<4x256xf32>
    tpu.vector_store %arg14[%c16_69, %c0_70], %97 {strides = array<i32>} : memref<36x256xf32, #tpu.memory_space<vmem>>, vector<4x256xf32>,
    %c0_71 = arith.constant 0 : index
    %c18_72 = arith.constant 18 : index
    %99 = vector.load %arg13[%c0_71, %c18_72] : memref<4x290xf32, #tpu.memory_space<vmem>>, vector<4x256xf32>
    %cst_73 = arith.constant 0.000000e+00 : f32
    %100 = vector.broadcast %cst_73 : f32 to vector<4x256xf32>
    %101 = vector.shape_cast %20 : vector<1x256xi1> to vector<1x256xi1>
    %102 = vector.broadcast %101 : vector<1x256xi1> to vector<4x256xi1>
    %103 = arith.select %102, %99, %100 : vector<4x256xi1>, vector<4x256xf32>
    %c20_74 = arith.constant 20 : index
    %c0_75 = arith.constant 0 : index
    %104 = vector.load %arg14[%c20_74, %c0_75] : memref<36x256xf32, #tpu.memory_space<vmem>>, vector<4x256xf32>
    tpu.vector_store %arg14[%c20_74, %c0_75], %103 {strides = array<i32>} : memref<36x256xf32, #tpu.memory_space<vmem>>, vector<4x256xf32>,
    %c0_76 = arith.constant 0 : index
    %c32_77 = arith.constant 32 : index
    %105 = vector.load %arg13[%c0_76, %c32_77] : memref<4x290xf32, #tpu.memory_space<vmem>>, vector<4x256xf32>
    %cst_78 = arith.constant 0.000000e+00 : f32
    %106 = vector.broadcast %cst_78 : f32 to vector<4x256xf32>
    %107 = vector.shape_cast %18 : vector<1x256xi1> to vector<1x256xi1>
    %108 = vector.broadcast %107 : vector<1x256xi1> to vector<4x256xi1>
    %109 = arith.select %108, %105, %106 : vector<4x256xi1>, vector<4x256xf32>
    %c24_79 = arith.constant 24 : index
    %c0_80 = arith.constant 0 : index
    %110 = vector.load %arg14[%c24_79, %c0_80] : memref<36x256xf32, #tpu.memory_space<vmem>>, vector<4x256xf32>
    tpu.vector_store %arg14[%c24_79, %c0_80], %109 {strides = array<i32>} : memref<36x256xf32, #tpu.memory_space<vmem>>, vector<4x256xf32>,
    %c0_81 = arith.constant 0 : index
    %c33_82 = arith.constant 33 : index
    %111 = vector.load %arg13[%c0_81, %c33_82] : memref<4x290xf32, #tpu.memory_space<vmem>>, vector<4x256xf32>
    %c28_83 = arith.constant 28 : index
    %c0_84 = arith.constant 0 : index
    %112 = vector.load %arg14[%c28_83, %c0_84] : memref<36x256xf32, #tpu.memory_space<vmem>>, vector<4x256xf32>
    tpu.vector_store %arg14[%c28_83, %c0_84], %111 {strides = array<i32>} : memref<36x256xf32, #tpu.memory_space<vmem>>, vector<4x256xf32>,
    %c0_85 = arith.constant 0 : index
    %c34_86 = arith.constant 34 : index
    %113 = vector.load %arg13[%c0_85, %c34_86] : memref<4x290xf32, #tpu.memory_space<vmem>>, vector<4x256xf32>
    %cst_87 = arith.constant 0.000000e+00 : f32
    %114 = vector.broadcast %cst_87 : f32 to vector<4x256xf32>
    %115 = vector.shape_cast %20 : vector<1x256xi1> to vector<1x256xi1>
    %116 = vector.broadcast %115 : vector<1x256xi1> to vector<4x256xi1>
    %117 = arith.select %116, %113, %114 : vector<4x256xi1>, vector<4x256xf32>
    %c32_88 = arith.constant 32 : index
    %c0_89 = arith.constant 0 : index
    %118 = vector.load %arg14[%c32_88, %c0_89] : memref<36x256xf32, #tpu.memory_space<vmem>>, vector<4x256xf32>
    tpu.vector_store %arg14[%c32_88, %c0_89], %117 {strides = array<i32>} : memref<36x256xf32, #tpu.memory_space<vmem>>, vector<4x256xf32>,
    %c0_90 = arith.constant 0 : index
    %c0_91 = arith.constant 0 : index
    %119 = vector.load %arg4[%c0_90, %c0_91] : memref<4x36xf32, #tpu.memory_space<vmem>>, vector<4x36xf32>
    %c0_92 = arith.constant 0 : index
    %c0_93 = arith.constant 0 : index
    %120 = vector.load %arg14[%c0_92, %c0_93] : memref<36x256xf32, #tpu.memory_space<vmem>>, vector<36x256xf32>
    %cst_94 = arith.constant dense<0.000000e+00> : vector<4x256xf32>
    %121 = tpu.matmul %119, %120, %cst_94 {dimension_numbers = #tpu.dot_dimension_numbers<[1], [0], [0], [1], [0, 0, 1, 1], [], []>} : vector<4x36xf32>, vector<36x256xf32>, vector<4x256xf32> -> vector<4x256xf32>
    %c0_95 = arith.constant 0 : index
    %c0_96 = arith.constant 0 : index
    %122 = vector.load %arg5[%c0_95, %c0_96] : memref<4x1xf32, #tpu.memory_space<vmem>>, vector<4x1xf32>
    %123 = vector.broadcast %122 : vector<4x1xf32> to vector<4x256xf32>
    %124 = arith.addf %121, %123 : vector<4x256xf32>
    %cst_97 = arith.constant dense<0.000000e+00> : vector<4xf32>
    %125 = vector.multi_reduction <add>, %124, %cst_97 [1] : vector<4x256xf32> to vector<4xf32>
    %126 = vector.shape_cast %125 : vector<4xf32> to vector<4x1xf32>
    %cst_98 = arith.constant 2.560000e+02 : f32
    %127 = vector.broadcast %cst_98 : f32 to vector<4x1xf32>
    %128 = arith.divf %126, %127 : vector<4x1xf32>
    %c0_99 = arith.constant 0 : index
    %c0_100 = arith.constant 0 : index
    %129 = vector.load %arg6[%c0_99, %c0_100] : memref<32x4xf32, #tpu.memory_space<vmem>>, vector<32x4xf32>
    %cst_101 = arith.constant dense<0.000000e+00> : vector<32x1xf32>
    %130 = tpu.matmul %129, %128, %cst_101 {dimension_numbers = #tpu.dot_dimension_numbers<[1], [0], [0], [1], [0, 0, 1, 1], [], []>} : vector<32x4xf32>, vector<4x1xf32>, vector<32x1xf32> -> vector<32x1xf32>
    %c0_102 = arith.constant 0 : index
    %c0_103 = arith.constant 0 : index
    %131 = vector.load %arg7[%c0_102, %c0_103] : memref<32x1xf32, #tpu.memory_space<vmem>>, vector<32x1xf32>
    %132 = arith.addf %130, %131 : vector<32x1xf32>
    %cst_104 = arith.constant 0.000000e+00 : f32
    %133 = vector.broadcast %cst_104 : f32 to vector<32x1xf32>
    %134 = arith.maximumf %132, %133 : vector<32x1xf32>
    %c0_105 = arith.constant 0 : index
    %c0_106 = arith.constant 0 : index
    %135 = vector.load %arg8[%c0_105, %c0_106] : memref<4x32xf32, #tpu.memory_space<vmem>>, vector<4x32xf32>
    %cst_107 = arith.constant dense<0.000000e+00> : vector<4x1xf32>
    %136 = tpu.matmul %135, %134, %cst_107 {dimension_numbers = #tpu.dot_dimension_numbers<[1], [0], [0], [1], [0, 0, 1, 1], [], []>} : vector<4x32xf32>, vector<32x1xf32>, vector<4x1xf32> -> vector<4x1xf32>
    %c0_108 = arith.constant 0 : index
    %c0_109 = arith.constant 0 : index
    %137 = vector.load %arg9[%c0_108, %c0_109] : memref<4x1xf32, #tpu.memory_space<vmem>>, vector<4x1xf32>
    %138 = arith.addf %136, %137 : vector<4x1xf32>
    %139 = arith.negf %138 : vector<4x1xf32>
    %140 = math.exp %139 : vector<4x1xf32>
    %cst_110 = arith.constant 1.000000e+00 : f32
    %141 = vector.broadcast %cst_110 : f32 to vector<4x1xf32>
    %142 = arith.addf %141, %140 : vector<4x1xf32>
    %143 = arith.divf %141, %142 : vector<4x1xf32>
    %c0_111 = arith.constant 0 : index
    %c0_112 = arith.constant 0 : index
    %144 = vector.load %arg10[%c0_111, %c0_112] : memref<4x32xf32, #tpu.memory_space<vmem>>, vector<4x32xf32>
    %cst_113 = arith.constant dense<0.000000e+00> : vector<4x1xf32>
    %145 = tpu.matmul %144, %134, %cst_113 {dimension_numbers = #tpu.dot_dimension_numbers<[1], [0], [0], [1], [0, 0, 1, 1], [], []>} : vector<4x32xf32>, vector<32x1xf32>, vector<4x1xf32> -> vector<4x1xf32>
    %c0_114 = arith.constant 0 : index
    %c0_115 = arith.constant 0 : index
    %146 = vector.load %arg11[%c0_114, %c0_115] : memref<4x1xf32, #tpu.memory_space<vmem>>, vector<4x1xf32>
    %147 = arith.addf %145, %146 : vector<4x1xf32>
    %148 = vector.broadcast %143 : vector<4x1xf32> to vector<4x256xf32>
    %149 = arith.mulf %148, %124 : vector<4x256xf32>
    %150 = arith.addf %24, %149 : vector<4x256xf32>
    %151 = vector.broadcast %147 : vector<4x1xf32> to vector<4x256xf32>
    %152 = arith.addf %150, %151 : vector<4x256xf32>
    %cst_116 = arith.constant 0.000000e+00 : f32
    %153 = vector.broadcast %cst_116 : f32 to vector<4x256xf32>
    %154 = arith.maximumf %152, %153 : vector<4x256xf32>
    %c0_117 = arith.constant 0 : index
    %c0_118 = arith.constant 0 : index
    %c0_119 = arith.constant 0 : index
    %155 = vector.load %arg12[%c0_117, %c0_118, %c0_119] : memref<1x4x256xf32, #tpu.memory_space<vmem>>, vector<1x4x256xf32>
    %156 = vector.shape_cast %155 : vector<1x4x256xf32> to vector<4x256xf32>
    %157 = vector.shape_cast %154 : vector<4x256xf32> to vector<1x4x256xf32>
    tpu.vector_store %arg12[%c0_117, %c0_118, %c0_119], %157 {strides = array<i32>} : memref<1x4x256xf32, #tpu.memory_space<vmem>>, vector<1x4x256xf32>,
    return
  }
  func.func @transform_0(%arg0: i32) -> (i32, i32, i32) {
    %c0_i32 = arith.constant 0 : i32
    %c0_i32_0 = arith.constant 0 : i32
    %c0_i32_1 = arith.constant 0 : i32
    return %arg0, %c0_i32, %c0_i32_0 : i32, i32, i32
  }
  func.func @transform_1(%arg0: i32) -> (i32, i32) {
    %c0_i32 = arith.constant 0 : i32
    %c0_i32_0 = arith.constant 0 : i32
    %c0_i32_1 = arith.constant 0 : i32
    return %c0_i32, %c0_i32_0 : i32, i32
  }
  func.func @transform_2(%arg0: i32) -> (i32, i32) {
    %c0_i32 = arith.constant 0 : i32
    %c0_i32_0 = arith.constant 0 : i32
    %c0_i32_1 = arith.constant 0 : i32
    return %c0_i32, %c0_i32_0 : i32, i32
  }
  func.func @transform_3(%arg0: i32) -> (i32, i32) {
    %c0_i32 = arith.constant 0 : i32
    %c0_i32_0 = arith.constant 0 : i32
    %c0_i32_1 = arith.constant 0 : i32
    return %c0_i32, %c0_i32_0 : i32, i32
  }
  func.func @transform_4(%arg0: i32) -> (i32, i32) {
    %c0_i32 = arith.constant 0 : i32
    %c0_i32_0 = arith.constant 0 : i32
    %c0_i32_1 = arith.constant 0 : i32
    return %c0_i32, %c0_i32_0 : i32, i32
  }
  func.func @transform_5(%arg0: i32) -> (i32, i32) {
    %c0_i32 = arith.constant 0 : i32
    %c0_i32_0 = arith.constant 0 : i32
    %c0_i32_1 = arith.constant 0 : i32
    return %c0_i32, %c0_i32_0 : i32, i32
  }
  func.func @transform_6(%arg0: i32) -> (i32, i32) {
    %c0_i32 = arith.constant 0 : i32
    %c0_i32_0 = arith.constant 0 : i32
    %c0_i32_1 = arith.constant 0 : i32
    return %c0_i32, %c0_i32_0 : i32, i32
  }
  func.func @transform_7(%arg0: i32) -> (i32, i32) {
    %c0_i32 = arith.constant 0 : i32
    %c0_i32_0 = arith.constant 0 : i32
    %c0_i32_1 = arith.constant 0 : i32
    return %c0_i32, %c0_i32_0 : i32, i32
  }
  func.func @transform_8(%arg0: i32) -> (i32, i32) {
    %c0_i32 = arith.constant 0 : i32
    %c0_i32_0 = arith.constant 0 : i32
    %c0_i32_1 = arith.constant 0 : i32
    return %c0_i32, %c0_i32_0 : i32, i32
  }
  func.func @transform_9(%arg0: i32) -> (i32, i32) {
    %c0_i32 = arith.constant 0 : i32
    %c0_i32_0 = arith.constant 0 : i32
    %c0_i32_1 = arith.constant 0 : i32
    return %c0_i32, %c0_i32_0 : i32, i32
  }
  func.func @transform_10(%arg0: i32) -> (i32, i32) {
    %c0_i32 = arith.constant 0 : i32
    %c0_i32_0 = arith.constant 0 : i32
    %c0_i32_1 = arith.constant 0 : i32
    return %c0_i32, %c0_i32_0 : i32, i32
  }
  func.func @transform_11(%arg0: i32) -> (i32, i32, i32) {
    %c0_i32 = arith.constant 0 : i32
    %c0_i32_0 = arith.constant 0 : i32
    %c0_i32_1 = arith.constant 0 : i32
    return %arg0, %c0_i32, %c0_i32_0 : i32, i32, i32
  }
}

</mosaic_0001>

<llo_original>
// kernel: tpu_custom_call.1
$region0: #{tpu_custom_call.1}
  #allocation0 [shape = 'u32[]', space=smem, size = 0x4, offset = 0x4, fixed_abs, tag = 'smem constant byte address 0x4 - core index']
  #allocation1 [shape = 'u32[72,128]{1,0:T(1,128)}', space=vmem, size = 0x9000, scoped, tag = 'internal scratch']
  #allocation2 [shape = 'f32[4,290]{1,0:T(4,128)}', space=vmem, size = 0x1800, scoped, tag = 'scratch operand']
  #allocation3 [shape = 'f32[36,256]{1,0:T(8,128)}', space=vmem, size = 0xa000, scoped, tag = 'scratch operand']
  %s0 = inlined_call_operand.vmem [shape: f32[2,4,256], index: 0, kind: input, shape index: {}]
  %s1 = inlined_call_operand.vmem [shape: f32[4,36], index: 1, kind: input, shape index: {}]
  %s2 = inlined_call_operand.vmem [shape: f32[4,1], index: 2, kind: input, shape index: {}]
  %s3 = inlined_call_operand.vmem [shape: f32[4,36], index: 3, kind: input, shape index: {}]
  %s4 = inlined_call_operand.vmem [shape: f32[4,1], index: 4, kind: input, shape index: {}]
  %s5 = inlined_call_operand.vmem [shape: f32[32,4], index: 5, kind: input, shape index: {}]
  %s6 = inlined_call_operand.vmem [shape: f32[32,1], index: 6, kind: input, shape index: {}]
  %s7 = inlined_call_operand.vmem [shape: f32[4,32], index: 7, kind: input, shape index: {}]
  %s8 = inlined_call_operand.vmem [shape: f32[4,1], index: 8, kind: input, shape index: {}]
  %s9 = inlined_call_operand.vmem [shape: f32[4,32], index: 9, kind: input, shape index: {}]
  %s10 = inlined_call_operand.vmem [shape: f32[4,1], index: 10, kind: input, shape index: {}]
  %s11 = inlined_call_operand.hbm [shape: f32[2,4,256], index: 11, kind: output, shape index: {}]
  %s12 = sld [smem:[#allocation0]]
  $region77: #{tpu_custom_call.1} parent=0
    _
  %s14 = ssub.s32 1, %s12
  %s15 = scalar_select 0, %s14, %s12
  $region1: #{tpu_custom_call.1} parent=0
    #allocation4 [shape = 'u8[8192]{0}', space=vmem, size = 0x2000, scoped, tag = 'output window, operand 0']
    #allocation5 [shape = 's32[2]{0}', space=sflag, size = 0x8, scoped, tag = 'scoped memory for tpu_custom_call.1']
    %16 = vsyncpa [#allocation5], 0
    %s17 = scalar_lea.sflag [#allocation5], 1
    %18 = vsyncpa %s17, 0
    loop: start=0, step=1, limit=4
    $region2: #{tpu_custom_call.1} parent=1 // loop_pre_header
      _
    $region3: #{tpu_custom_call.1} parent=1 // loop_header
      %s20 = sphi 0, %s24
      %p21 = scmp.ge.s32.totalorder %s20, 4
      %s30 = sphi 0, %s32
      %s33 = sphi 0, %s30
      %s34 = sphi 0, %s33
      %s50 = sphi 0, %s34
      %s54 = sphi 0, %s54
      %s56 = sphi 0, %s54
      %s57 = sphi 0, %s56
      %s71 = sphi 0, %s57
      %s75 = sphi 0, %s75
      %s77 = sphi 0, %s75
      %s78 = sphi 0, %s77
      %s92 = sphi 0, %s78
      %s96 = sphi 0, %s96
      %s98 = sphi 0, %s96
      %s99 = sphi 0, %s98
      %s113 = sphi 0, %s99
      %s117 = sphi 0, %s117
      %s119 = sphi 0, %s117
      %s120 = sphi 0, %s119
      %s134 = sphi 0, %s120
      %s138 = sphi 0, %s138
      %s140 = sphi 0, %s138
      %s141 = sphi 0, %s140
      %s155 = sphi 0, %s141
      %s159 = sphi 0, %s159
      %s161 = sphi 0, %s159
      %s162 = sphi 0, %s161
      %s176 = sphi 0, %s162
      %s180 = sphi 0, %s180
      %s182 = sphi 0, %s180
      %s183 = sphi 0, %s182
      %s197 = sphi 0, %s183
      %s201 = sphi 0, %s201
      %s203 = sphi 0, %s201
      %s204 = sphi 0, %s203
      %s218 = sphi 0, %s204
      %s222 = sphi 0, %s222
      %s224 = sphi 0, %s222
      %s225 = sphi 0, %s224
      %s239 = sphi 0, %s225
      %s243 = sphi 0, %s243
      %s245 = sphi 0, %s243
      %s246 = sphi 0, %s245
      %s260 = sphi 0, %s246
      %s266 = sphi 0, %s268
      %s269 = sphi 0, %s266
      %s270 = sphi 0, %s269
      %s286 = sphi 0, %s270
    $region4: #{tpu_custom_call.1} parent=1 // loop_header_branch
      %23 = sbr.rel (%p21) target = $region8
    $region5: #{tpu_custom_call.1} parent=1 // loop_body
      %s25 = ssub.s32 %s20, 1
      %s26 = ssub.s32 %s20, 2
      %s27 = sadd.s32 %s20, 1
      %s28 = ssub.s32 %s20, %s27
      %p29 = scmp.eq.s32.totalorder %s28, 0
      %s31 = sadd.s32 %s30, 1
      %s32 = scalar_select %p29, %s30, %s31
      %p35 = pneg %p29
      %p36 = scmp.eq.s32.totalorder %s20, 1
      %p37 = por %p35, %p36
      %p38 = scmp.ne.s32.totalorder %s30, %s33
      %p39 = scmp.eq.s32.totalorder %s20, 0
      %p40 = por %p38, %p39
      %p41 = scmp.ne.s32.totalorder %s30, %s33
      %p42 = scmp.eq.s32.totalorder %s25, 1
      %p43 = por %p41, %p42
      %p44 = scmp.ne.s32.totalorder %s33, %s34
      %p45 = scmp.eq.s32.totalorder %s25, 0
      %p46 = por %p44, %p45
      %p47 = scmp.ne.s32.totalorder %s33, %s34
      %p48 = scmp.eq.s32.totalorder %s26, 1
      %p49 = por %p47, %p48
      %p51 = scmp.ne.s32.totalorder %s34, %s50
      %p52 = scmp.eq.s32.totalorder %s26, 0
      %p53 = por %p51, %p52
      %s55 = sadd.s32 %s54, 1
      %p58 = scmp.eq.s32.totalorder %s20, 1
      %p59 = scmp.ne.s32.totalorder %s54, %s56
      %p60 = scmp.eq.s32.totalorder %s20, 0
      %p61 = por %p59, %p60
      %p62 = scmp.ne.s32.totalorder %s54, %s56
      %p63 = scmp.eq.s32.totalorder %s25, 1
      %p64 = por %p62, %p63
      %p65 = scmp.ne.s32.totalorder %s56, %s57
      %p66 = scmp.eq.s32.totalorder %s25, 0
      %p67 = por %p65, %p66
      %p68 = scmp.ne.s32.totalorder %s56, %s57
      %p69 = scmp.eq.s32.totalorder %s26, 1
      %p70 = por %p68, %p69
      %p72 = scmp.ne.s32.totalorder %s57, %s71
      %p73 = scmp.eq.s32.totalorder %s26, 0
      %p74 = por %p72, %p73
      %s76 = sadd.s32 %s75, 1
      %p79 = scmp.eq.s32.totalorder %s20, 1
      %p80 = scmp.ne.s32.totalorder %s75, %s77
      %p81 = scmp.eq.s32.totalorder %s20, 0
      %p82 = por %p80, %p81
      %p83 = scmp.ne.s32.totalorder %s75, %s77
      %p84 = scmp.eq.s32.totalorder %s25, 1
      %p85 = por %p83, %p84
      %p86 = scmp.ne.s32.totalorder %s77, %s78
      %p87 = scmp.eq.s32.totalorder %s25, 0
      %p88 = por %p86, %p87
      %p89 = scmp.ne.s32.totalorder %s77, %s78
      %p90 = scmp.eq.s32.totalorder %s26, 1
      %p91 = por %p89, %p90
      %p93 = scmp.ne.s32.totalorder %s78, %s92
      %p94 = scmp.eq.s32.totalorder %s26, 0
      %p95 = por %p93, %p94
      %s97 = sadd.s32 %s96, 1
      %p100 = scmp.eq.s32.totalorder %s20, 1
      %p101 = scmp.ne.s32.totalorder %s96, %s98
      %p102 = scmp.eq.s32.totalorder %s20, 0
      %p103 = por %p101, %p102
      %p104 = scmp.ne.s32.totalorder %s96, %s98
      %p105 = scmp.eq.s32.totalorder %s25, 1
      %p106 = por %p104, %p105
      %p107 = scmp.ne.s32.totalorder %s98, %s99
      %p108 = scmp.eq.s32.totalorder %s25, 0
      %p109 = por %p107, %p108
      %p110 = scmp.ne.s32.totalorder %s98, %s99
      %p111 = scmp.eq.s32.totalorder %s26, 1
      %p112 = por %p110, %p111
      %p114 = scmp.ne.s32.totalorder %s99, %s113
      %p115 = scmp.eq.s32.totalorder %s26, 0
      %p116 = por %p114, %p115
      %s118 = sadd.s32 %s117, 1
      %p121 = scmp.eq.s32.totalorder %s20, 1
      %p122 = scmp.ne.s32.totalorder %s117, %s119
      %p123 = scmp.eq.s32.totalorder %s20, 0
      %p124 = por %p122, %p123
      %p125 = scmp.ne.s32.totalorder %s117, %s119
      %p126 = scmp.eq.s32.totalorder %s25, 1
      %p127 = por %p125, %p126
      %p128 = scmp.ne.s32.totalorder %s119, %s120
      %p129 = scmp.eq.s32.totalorder %s25, 0
      %p130 = por %p128, %p129
      %p131 = scmp.ne.s32.totalorder %s119, %s120
      %p132 = scmp.eq.s32.totalorder %s26, 1
      %p133 = por %p131, %p132
      %p135 = scmp.ne.s32.totalorder %s120, %s134
      %p136 = scmp.eq.s32.totalorder %s26, 0
      %p137 = por %p135, %p136
      %s139 = sadd.s32 %s138, 1
      %p142 = scmp.eq.s32.totalorder %s20, 1
      %p143 = scmp.ne.s32.totalorder %s138, %s140
      %p144 = scmp.eq.s32.totalorder %s20, 0
      %p145 = por %p143, %p144
      %p146 = scmp.ne.s32.totalorder %s138, %s140
      %p147 = scmp.eq.s32.totalorder %s25, 1
      %p148 = por %p146, %p147
      %p149 = scmp.ne.s32.totalorder %s140, %s141
      %p150 = scmp.eq.s32.totalorder %s25, 0
      %p151 = por %p149, %p150
      %p152 = scmp.ne.s32.totalorder %s140, %s141
      %p153 = scmp.eq.s32.totalorder %s26, 1
      %p154 = por %p152, %p153
      %p156 = scmp.ne.s32.totalorder %s141, %s155
      %p157 = scmp.eq.s32.totalorder %s26, 0
      %p158 = por %p156, %p157
      %s160 = sadd.s32 %s159, 1
      %p163 = scmp.eq.s32.totalorder %s20, 1
      %p164 = scmp.ne.s32.totalorder %s159, %s161
      %p165 = scmp.eq.s32.totalorder %s20, 0
      %p166 = por %p164, %p165
      %p167 = scmp.ne.s32.totalorder %s159, %s161
      %p168 = scmp.eq.s32.totalorder %s25, 1
      %p169 = por %p167, %p168
      %p170 = scmp.ne.s32.totalorder %s161, %s162
      %p171 = scmp.eq.s32.totalorder %s25, 0
      %p172 = por %p170, %p171
      %p173 = scmp.ne.s32.totalorder %s161, %s162
      %p174 = scmp.eq.s32.totalorder %s26, 1
      %p175 = por %p173, %p174
      %p177 = scmp.ne.s32.totalorder %s162, %s176
      %p178 = scmp.eq.s32.totalorder %s26, 0
      %p179 = por %p177, %p178
      %s181 = sadd.s32 %s180, 1
      %p184 = scmp.eq.s32.totalorder %s20, 1
      %p185 = scmp.ne.s32.totalorder %s180, %s182
      %p186 = scmp.eq.s32.totalorder %s20, 0
      %p187 = por %p185, %p186
      %p188 = scmp.ne.s32.totalorder %s180, %s182
      %p189 = scmp.eq.s32.totalorder %s25, 1
      %p190 = por %p188, %p189
      %p191 = scmp.ne.s32.totalorder %s182, %s183
      %p192 = scmp.eq.s32.totalorder %s25, 0
      %p193 = por %p191, %p192
      %p194 = scmp.ne.s32.totalorder %s182, %s183
      %p195 = scmp.eq.s32.totalorder %s26, 1
      %p196 = por %p194, %p195
      %p198 = scmp.ne.s32.totalorder %s183, %s197
      %p199 = scmp.eq.s32.totalorder %s26, 0
      %p200 = por %p198, %p199
      %s202 = sadd.s32 %s201, 1
      %p205 = scmp.eq.s32.totalorder %s20, 1
      %p206 = scmp.ne.s32.totalorder %s201, %s203
      %p207 = scmp.eq.s32.totalorder %s20, 0
      %p208 = por %p206, %p207
      %p209 = scmp.ne.s32.totalorder %s201, %s203
      %p210 = scmp.eq.s32.totalorder %s25, 1
      %p211 = por %p209, %p210
      %p212 = scmp.ne.s32.totalorder %s203, %s204
      %p213 = scmp.eq.s32.totalorder %s25, 0
      %p214 = por %p212, %p213
      %p215 = scmp.ne.s32.totalorder %s203, %s204
      %p216 = scmp.eq.s32.totalorder %s26, 1
      %p217 = por %p215, %p216
      %p219 = scmp.ne.s32.totalorder %s204, %s218
      %p220 = scmp.eq.s32.totalorder %s26, 0
      %p221 = por %p219, %p220
      %s223 = sadd.s32 %s222, 1
      %p226 = scmp.eq.s32.totalorder %s20, 1
      %p227 = scmp.ne.s32.totalorder %s222, %s224
      %p228 = scmp.eq.s32.totalorder %s20, 0
      %p229 = por %p227, %p228
      %p230 = scmp.ne.s32.totalorder %s222, %s224
      %p231 = scmp.eq.s32.totalorder %s25, 1
      %p232 = por %p230, %p231
      %p233 = scmp.ne.s32.totalorder %s224, %s225
      %p234 = scmp.eq.s32.totalorder %s25, 0
      %p235 = por %p233, %p234
      %p236 = scmp.ne.s32.totalorder %s224, %s225
      %p237 = scmp.eq.s32.totalorder %s26, 1
      %p238 = por %p236, %p237
      %p240 = scmp.ne.s32.totalorder %s225, %s239
      %p241 = scmp.eq.s32.totalorder %s26, 0
      %p242 = por %p240, %p241
      %s244 = sadd.s32 %s243, 1
      %p247 = scmp.eq.s32.totalorder %s20, 1
      %p248 = scmp.ne.s32.totalorder %s243, %s245
      %p249 = scmp.eq.s32.totalorder %s20, 0
      %p250 = por %p248, %p249
      %p251 = scmp.ne.s32.totalorder %s243, %s245
      %p252 = scmp.eq.s32.totalorder %s25, 1
      %p253 = por %p251, %p252
      %p254 = scmp.ne.s32.totalorder %s245, %s246
      %p255 = scmp.eq.s32.totalorder %s25, 0
      %p256 = por %p254, %p255
      %p257 = scmp.ne.s32.totalorder %s245, %s246
      %p258 = scmp.eq.s32.totalorder %s26, 1
      %p259 = por %p257, %p258
      %p261 = scmp.ne.s32.totalorder %s246, %s260
      %p262 = scmp.eq.s32.totalorder %s26, 0
      %p263 = por %p261, %p262
      %s264 = ssub.s32 %s20, %s27
      %p265 = scmp.eq.s32.totalorder %s264, 0
      %s267 = sadd.s32 %s266, 1
      %s268 = scalar_select %p265, %s266, %s267
      %p271 = pneg %p265
      %p272 = scmp.eq.s32.totalorder %s20, 1
      %p273 = por %p271, %p272
      %p274 = scmp.ne.s32.totalorder %s266, %s269
      %p275 = scmp.eq.s32.totalorder %s20, 0
      %p276 = por %p274, %p275
      %p277 = scmp.ne.s32.totalorder %s266, %s269
      %p278 = scmp.eq.s32.totalorder %s25, 1
      %p279 = por %p277, %p278
      %p280 = scmp.ne.s32.totalorder %s269, %s270
      %p281 = scmp.eq.s32.totalorder %s25, 0
      %p282 = por %p280, %p281
      %p283 = scmp.ne.s32.totalorder %s269, %s270
      %p284 = scmp.eq.s32.totalorder %s26, 1
      %p285 = por %p283, %p284
      %p287 = scmp.ne.s32.totalorder %s270, %s286
      %p288 = scmp.eq.s32.totalorder %s26, 0
      %p289 = por %p287, %p288
      %p290 = scmp.le.s32.totalorder 1, %s20
      %p291 = scmp.lt.s32.totalorder %s20, 3
      %p292 = pnand %p290, %p291
      %p293 = pneg %p292
      // Predicated region
      $region9: #{tpu_custom_call.1} parent=5 // pred_check
        _
      $region10: #{tpu_custom_call.1} parent=5 // pred_check_branch
        %295 = sbr.rel (%p292) target = $region12
      $region11: #{tpu_custom_call.1} parent=5 // pred_region
        %s296 = ssub.s32 %s20, 1
        // Predicated region
        $region13: #{tpu_custom_call.1} parent=11 // pred_check
          %p297 = pneg %p67
        $region14: #{tpu_custom_call.1} parent=11 // pred_check_branch
          %299 = sbr.rel (%p297) target = $region16
        $region15: #{tpu_custom_call.1} parent=11 // pred_region
          _
        $region16: #{tpu_custom_call.1} parent=11 // pred_fallthru
          _
        // Predicated region
        $region17: #{tpu_custom_call.1} parent=11 // pred_check
          %p300 = pneg %p88
        $region18: #{tpu_custom_call.1} parent=11 // pred_check_branch
          %302 = sbr.rel (%p300) target = $region20
        $region19: #{tpu_custom_call.1} parent=11 // pred_region
          _
        $region20: #{tpu_custom_call.1} parent=11 // pred_fallthru
          _
        // Predicated region
        $region21: #{tpu_custom_call.1} parent=11 // pred_check
          %p303 = pneg %p109
        $region22: #{tpu_custom_call.1} parent=11 // pred_check_branch
          %305 = sbr.rel (%p303) target = $region24
        $region23: #{tpu_custom_call.1} parent=11 // pred_region
          _
        $region24: #{tpu_custom_call.1} parent=11 // pred_fallthru
          _
        // Predicated region
        $region25: #{tpu_custom_call.1} parent=11 // pred_check
          %p306 = pneg %p130
        $region26: #{tpu_custom_call.1} parent=11 // pred_check_branch
          %308 = sbr.rel (%p306) target = $region28
        $region27: #{tpu_custom_call.1} parent=11 // pred_region
          _
        $region28: #{tpu_custom_call.1} parent=11 // pred_fallthru
          _
        // Predicated region
        $region29: #{tpu_custom_call.1} parent=11 // pred_check
          %p309 = pneg %p151
        $region30: #{tpu_custom_call.1} parent=11 // pred_check_branch
          %311 = sbr.rel (%p309) target = $region32
        $region31: #{tpu_custom_call.1} parent=11 // pred_region
          _
        $region32: #{tpu_custom_call.1} parent=11 // pred_fallthru
          _
        // Predicated region
        $region33: #{tpu_custom_call.1} parent=11 // pred_check
          %p312 = pneg %p172
        $region34: #{tpu_custom_call.1} parent=11 // pred_check_branch
          %314 = sbr.rel (%p312) target = $region36
        $region35: #{tpu_custom_call.1} parent=11 // pred_region
          _
        $region36: #{tpu_custom_call.1} parent=11 // pred_fallthru
          _
        // Predicated region
        $region37: #{tpu_custom_call.1} parent=11 // pred_check
          %p315 = pneg %p193
        $region38: #{tpu_custom_call.1} parent=11 // pred_check_branch
          %317 = sbr.rel (%p315) target = $region40
        $region39: #{tpu_custom_call.1} parent=11 // pred_region
          _
        $region40: #{tpu_custom_call.1} parent=11 // pred_fallthru
          _
        // Predicated region
        $region41: #{tpu_custom_call.1} parent=11 // pred_check
          %p318 = pneg %p214
        $region42: #{tpu_custom_call.1} parent=11 // pred_check_branch
          %320 = sbr.rel (%p318) target = $region44
        $region43: #{tpu_custom_call.1} parent=11 // pred_region
          _
        $region44: #{tpu_custom_call.1} parent=11 // pred_fallthru
          _
        // Predicated region
        $region45: #{tpu_custom_call.1} parent=11 // pred_check
          %p321 = pneg %p235
        $region46: #{tpu_custom_call.1} parent=11 // pred_check_branch
          %323 = sbr.rel (%p321) target = $region48
        $region47: #{tpu_custom_call.1} parent=11 // pred_region
          _
        $region48: #{tpu_custom_call.1} parent=11 // pred_fallthru
          _
        // Predicated region
        $region49: #{tpu_custom_call.1} parent=11 // pred_check
          %p324 = pneg %p256
        $region50: #{tpu_custom_call.1} parent=11 // pred_check_branch
          %326 = sbr.rel (%p324) target = $region52
        $region51: #{tpu_custom_call.1} parent=11 // pred_region
          _
        $region52: #{tpu_custom_call.1} parent=11 // pred_fallthru
          _
      $region12: #{tpu_custom_call.1} parent=5 // pred_fallthru
        _
      %p327 = scmp.lt.s32.totalorder %s20, 2
      // Predicated region
      $region53: #{tpu_custom_call.1} parent=5 // pred_check
        %p328 = pneg %p327
      $region54: #{tpu_custom_call.1} parent=5 // pred_check_branch
        %330 = sbr.rel (%p328) target = $region56
      $region55: #{tpu_custom_call.1} parent=5 // pred_region
        // Predicated region
        $region57: #{tpu_custom_call.1} parent=55 // pred_check
          %p331 = pneg %p40
        $region58: #{tpu_custom_call.1} parent=55 // pred_check_branch
          %333 = sbr.rel (%p331) target = $region60
        $region59: #{tpu_custom_call.1} parent=55 // pred_region
          %p334 = scmp.lt.s32.totalorder %s20, 1
          %s335 = scalar_select %p334, %s20, 1
          %s336 = smul.addr %s335, 2
          %s337 = smul.addr %s336, 4
          %s338 = scalar_lea.vmem %s0, %s337
        $region60: #{tpu_custom_call.1} parent=55 // pred_fallthru
          _
      $region56: #{tpu_custom_call.1} parent=5 // pred_fallthru
        _
      %p339 = scmp.le.s32.totalorder 1, %s20
      %p340 = scmp.lt.s32.totalorder %s20, 3
      %p341 = pnand %p339, %p340
      %p342 = pneg %p341
      // Predicated region
      $region61: #{tpu_custom_call.1} parent=5 // pred_check
        _
      $region62: #{tpu_custom_call.1} parent=5 // pred_check_branch
        %344 = sbr.rel (%p341) target = $region64
      $region63: #{tpu_custom_call.1} parent=5 // pred_region
        %s345 = ssub.s32 %s20, 1
        %p346 = scmp.lt.s32.totalorder %s25, 1
        %s347 = scalar_select %p346, %s25, 1
        %s348 = smul.addr %s347, 2
        %s349 = smul.addr %s348, 4
        %s350 = scalar_lea.vmem %s0, %s349
        %p351 = pneg %p46
        %p352 = pneg %p43
        %p353 = pneg %p67
        %p354 = pneg %p64
        %p355 = pneg %p88
        %p356 = pneg %p85
        %p357 = pneg %p109
        %p358 = pneg %p106
        %p359 = pneg %p130
        %p360 = pneg %p127
        %p361 = pneg %p151
        %p362 = pneg %p148
        %p363 = pneg %p172
        %p364 = pneg %p169
        %p365 = pneg %p193
        %p366 = pneg %p190
        %p367 = pneg %p214
        %p368 = pneg %p211
        %p369 = pneg %p235
        %p370 = pneg %p232
        %p371 = pneg %p256
        %p372 = pneg %p253
        %p373 = pneg %p282
        %p374 = pneg %p279
        %s375 = sand.u32 %s269, 1
        %s376 = scalar_lea.sflag [#allocation5], %s375
        %s377 = sand.u32 %s269, 1
        %s378 = smul.addr %s377, 8
        %s379 = scalar_lea.vmem [#allocation4], %s378
        %p380 = scmp.lt.s32.totalorder %s25, 1
        %s381 = scalar_select %p380, %s25, 1
        %s382 = smul.addr %s381, 2
        %s383 = smul.addr %s382, 4
        %s384 = scalar_lea.vmem %s0, %s383
        %v385 = vlaneseq
        %v386 = vand.u32 %v385, 127
        %v387 = vadd.s32 %v386, 128
        %vm388 = vcmp.lt.s32.totalorder %v386, 0
        %v389 = vsub.s32 0, %v386
        %v390 = vsel %vm388, %v389, %v386
        %v391 = vshrl.u32 %v390, 4
        %v392 = vand.u32 %v390, 15
        %v393 = vsub.s32 0, %v392
        %v394 = vsel %vm388, %v393, %v392
        %vm395 = vcmp.lt.s32.totalorder %v387, 0
        %v396 = vsub.s32 0, %v387
        %v397 = vsel %vm395, %v396, %v387
        %v398 = vshrl.u32 %v397, 4
        %v399 = vand.u32 %v397, 15
        %v400 = vsub.s32 0, %v399
        %v401 = vsel %vm395, %v400, %v399
        %vm402 = vcmp.ne.s32.totalorder %v394, 0
        %vm403 = vcmp.ne.s32.totalorder %v401, 0
        %vm404 = vcmp.lt.s32.totalorder %v394, 0
        %vm405 = vcmp.lt.s32.totalorder %v401, 0
        %vm406 = vmand %vm404, %vm402
        %vm407 = vmand %vm405, %vm403
        %v408 = vadd.s32 %v394, 16
        %v409 = vadd.s32 %v401, 16
        %v410 = vsel %vm406, %v408, %v394
        %v411 = vsel %vm407, %v409, %v401
        %vm412 = vcmp.ge.s32.totalorder %v410, 1
        %vm413 = vcmp.ge.s32.totalorder %v411, 1
        %vm414 = vcmp.le.s32.totalorder %v410, 14
        %vm415 = vcmp.le.s32.totalorder %v411, 14
        %416 = vst [vmem:[#allocation2] sm:$0xff] 0.0
        %vm417 = vcmask 273408
        %418 = vst.msk [vmem:[#allocation2 + $0x8] sm:$0xf] %vm417, 0.0
        %v419 = vld [vmem:[%s384] sm:$0xff]
        %421 = vrot.lane.b32.xlu0 %v419, 17
        %v422 = vpop.permute.xlu0 %421
        %v423 = vrot.slane %v422, 4
        %vm424 = vcmask 138240
        %v425 = vsel %vm424, %v423, %v422
        %vm428 = vcmask 1043592
        %vm429 = vcmask 1047556
        %vm430 = vmor %vm429, %vm428
        %431 = vst.msk [vmem:[#allocation2] sm:$0xff] %vm430, %v425
        %vm432 = vcmask 134144
        %433 = vst.msk [vmem:[#allocation2 + $0x8] sm:$0xf] %vm432, %v423
        %v434 = vld [vmem:[#allocation2] sm:$0xff]
        %v435 = vsel %vm412, 1, 0
        %v436 = vsel %vm413, 1, 0
        %vm437 = vcmp.eq.s32.totalorder %v435, 1
        %vm438 = vcmp.eq.s32.totalorder %v436, 1
        %440 = vst [vmem:[#allocation1] ss:$2 sm:$0xff] %v434
        %v441 = vld.sshfl [vmem:[#allocation1] sm:$0xff pattern:$0x75316420]
        %v442 = vld.sshfl [vmem:[#allocation1 + $0x8] sm:$0xff pattern:$0x75316420]
        %v445 = vsel %vm437, %v441, 0.0
        %v446 = vsel %vm438, %v442, 0.0
        %447 = vst [vmem:[#allocation3] sm:$0xf] %v445
        %448 = vst [vmem:[#allocation3 + $0x8] sm:$0xf] %v446
        %v449 = vld [vmem:[#allocation2] sm:$0xff]
        %v450 = vld [vmem:[#allocation2 + $0x8] sm:$0xf]
        %s453 = scalar_lea.vmem [#allocation1], 1
        %454 = vst [vmem:[%s453] ss:$2 sm:$0xff] %v449
        %s455 = scalar_lea.vmem [#allocation1], 17
        %456 = vst [vmem:[%s455] ss:$2 sm:$0xff] %v450
        %v457 = vld.sshfl [vmem:[#allocation1] sm:$0xff pattern:$0x75316420]
        %v458 = vld.sshfl [vmem:[#allocation1 + $0x8] sm:$0xff pattern:$0x75316420]
        %v459 = vld.sshfl [vmem:[#allocation1 + $0x10] sm:$0xff pattern:$0x75316420]
        %460 = vrot.lane.b32.xlu0 %v457, 127
        %v461 = vpop.permute.xlu0 %460
        %462 = vrot.lane.b32.xlu0 %v458, 127
        %v463 = vpop.permute.xlu0 %462
        %464 = vrot.lane.b32.xlu0 %v459, 127
        %v465 = vpop.permute.xlu0 %464
        %vm466 = vcmask 1039360
        %v467 = vsel %vm466, %v461, %v463
        %v468 = vsel %vm466, %v463, %v465
        %471 = vst [vmem:[#allocation3] sm:$0xf0] %v467
        %472 = vst [vmem:[#allocation3 + $0x8] sm:$0xf0] %v468
        %v473 = vld [vmem:[#allocation2] sm:$0xff]
        %v474 = vld [vmem:[#allocation2 + $0x8] sm:$0xf]
        %v475 = vsel %vm414, 1, 0
        %v476 = vsel %vm415, 1, 0
        %vm477 = vcmp.eq.s32.totalorder %v475, 1
        %vm478 = vcmp.eq.s32.totalorder %v476, 1
        %481 = vst [vmem:[#allocation1] ss:$2 sm:$0xff] %v473
        %s482 = scalar_lea.vmem [#allocation1], 16
        %483 = vst [vmem:[%s482] ss:$2 sm:$0xff] %v474
        %v484 = vld.sshfl [vmem:[#allocation1] sm:$0xff pattern:$0x75316420]
        %v485 = vld.sshfl [vmem:[#allocation1 + $0x8] sm:$0xff pattern:$0x75316420]
        %v486 = vld.sshfl [vmem:[#allocation1 + $0x10] sm:$0xff pattern:$0x75316420]
        %487 = vrot.lane.b32.xlu0 %v484, 126
        %v488 = vpop.permute.xlu0 %487
        %489 = vrot.lane.b32.xlu0 %v485, 126
        %v490 = vpop.permute.xlu0 %489
        %491 = vrot.lane.b32.xlu0 %v486, 126
        %v492 = vpop.permute.xlu0 %491
        %vm493 = vcmask 1031168
        %v494 = vsel %vm493, %v488, %v490
        %v495 = vsel %vm493, %v490, %v492
        %v498 = vsel %vm477, %v494, 0.0
        %v499 = vsel %vm478, %v495, 0.0
        %500 = vst [vmem:[#allocation3 + $0x10] sm:$0xf] %v498
        %501 = vst [vmem:[#allocation3 + $0x18] sm:$0xf] %v499
        %v502 = vld [vmem:[#allocation2] sm:$0xff]
        %v503 = vld [vmem:[#allocation2 + $0x8] sm:$0xf]
        %506 = vst [vmem:[#allocation1] ss:$2 sm:$0xff] %v502
        %s507 = scalar_lea.vmem [#allocation1], 16
        %508 = vst [vmem:[%s507] ss:$2 sm:$0xff] %v503
        %v509 = vld.sshfl [vmem:[#allocation1] sm:$0xff pattern:$0x75316420]
        %v510 = vld.sshfl [vmem:[#allocation1 + $0x8] sm:$0xff pattern:$0x75316420]
        %v511 = vld.sshfl [vmem:[#allocation1 + $0x10] sm:$0xff pattern:$0x75316420]
        %512 = vrot.lane.b32.xlu0 %v509, 112
        %v513 = vpop.permute.xlu0 %512
        %514 = vrot.lane.b32.xlu0 %v510, 112
        %v515 = vpop.permute.xlu0 %514
        %516 = vrot.lane.b32.xlu0 %v511, 112
        %v517 = vpop.permute.xlu0 %516
        %vm518 = vcmask 916480
        %v519 = vsel %vm518, %v513, %v515
        %v520 = vsel %vm518, %v515, %v517
        %v523 = vsel %vm437, %v519, 0.0
        %v524 = vsel %vm438, %v520, 0.0
        %v527 = vrot.slane %v523, 4
        %v528 = vrot.slane %v524, 4
        %531 = vst [vmem:[#allocation3 + $0x10] sm:$0xf0] %v527
        %532 = vst [vmem:[#allocation3 + $0x18] sm:$0xf0] %v528
        %v533 = vld [vmem:[#allocation2] sm:$0xff]
        %v534 = vld [vmem:[#allocation2 + $0x8] sm:$0xf]
        %537 = vst [vmem:[#allocation1] ss:$2 sm:$0xff] %v533
        %s538 = scalar_lea.vmem [#allocation1], 16
        %539 = vst [vmem:[%s538] ss:$2 sm:$0xff] %v534
        %v540 = vld.sshfl [vmem:[#allocation1] sm:$0xff pattern:$0x75316420]
        %v541 = vld.sshfl [vmem:[#allocation1 + $0x8] sm:$0xff pattern:$0x75316420]
        %v542 = vld.sshfl [vmem:[#allocation1 + $0x10] sm:$0xff pattern:$0x75316420]
        %543 = vrot.lane.b32.xlu0 %v540, 111
        %v544 = vpop.permute.xlu0 %543
        %545 = vrot.lane.b32.xlu0 %v541, 111
        %v546 = vpop.permute.xlu0 %545
        %547 = vrot.lane.b32.xlu0 %v542, 111
        %v548 = vpop.permute.xlu0 %547
        %vm549 = vcmask 908288
        %v550 = vsel %vm549, %v544, %v546
        %v551 = vsel %vm549, %v546, %v548
        %554 = vst [vmem:[#allocation3 + $0x20] sm:$0xf] %v550
        %555 = vst [vmem:[#allocation3 + $0x28] sm:$0xf] %v551
        %v556 = vld [vmem:[#allocation2] sm:$0xff]
        %v557 = vld [vmem:[#allocation2 + $0x8] sm:$0xf]
        %560 = vst [vmem:[#allocation1] ss:$2 sm:$0xff] %v556
        %s561 = scalar_lea.vmem [#allocation1], 16
        %562 = vst [vmem:[%s561] ss:$2 sm:$0xff] %v557
        %v563 = vld.sshfl [vmem:[#allocation1] sm:$0xff pattern:$0x75316420]
        %v564 = vld.sshfl [vmem:[#allocation1 + $0x8] sm:$0xff pattern:$0x75316420]
        %v565 = vld.sshfl [vmem:[#allocation1 + $0x10] sm:$0xff pattern:$0x75316420]
        %566 = vrot.lane.b32.xlu0 %v563, 110
        %v567 = vpop.permute.xlu0 %566
        %568 = vrot.lane.b32.xlu0 %v564, 110
        %v569 = vpop.permute.xlu0 %568
        %570 = vrot.lane.b32.xlu0 %v565, 110
        %v571 = vpop.permute.xlu0 %570
        %vm572 = vcmask 900096
        %v573 = vsel %vm572, %v567, %v569
        %v574 = vsel %vm572, %v569, %v571
        %v577 = vsel %vm477, %v573, 0.0
        %v578 = vsel %vm478, %v574, 0.0
        %v581 = vrot.slane %v577, 4
        %v582 = vrot.slane %v578, 4
        %585 = vst [vmem:[#allocation3 + $0x20] sm:$0xf0] %v581
        %586 = vst [vmem:[#allocation3 + $0x28] sm:$0xf0] %v582
        %v587 = vld [vmem:[#allocation2] sm:$0xff]
        %v588 = vld [vmem:[#allocation2 + $0x8] sm:$0xf]
        %591 = vst [vmem:[#allocation1] ss:$2 sm:$0xff] %v587
        %s592 = scalar_lea.vmem [#allocation1], 16
        %593 = vst [vmem:[%s592] ss:$2 sm:$0xff] %v588
        %v594 = vld.sshfl [vmem:[#allocation1] sm:$0xff pattern:$0x75316420]
        %v595 = vld.sshfl [vmem:[#allocation1 + $0x8] sm:$0xff pattern:$0x75316420]
        %v596 = vld.sshfl [vmem:[#allocation1 + $0x10] sm:$0xff pattern:$0x75316420]
        %597 = vrot.lane.b32.xlu0 %v594, 96
        %v598 = vpop.permute.xlu0 %597
        %599 = vrot.lane.b32.xlu0 %v595, 96
        %v600 = vpop.permute.xlu0 %599
        %601 = vrot.lane.b32.xlu0 %v596, 96
        %v602 = vpop.permute.xlu0 %601
        %vm603 = vcmask 785408
        %v604 = vsel %vm603, %v598, %v600
        %v605 = vsel %vm603, %v600, %v602
        %v608 = vsel %vm437, %v604, 0.0
        %v609 = vsel %vm438, %v605, 0.0
        %610 = vst [vmem:[#allocation3 + $0x30] sm:$0xf] %v608
        %611 = vst [vmem:[#allocation3 + $0x38] sm:$0xf] %v609
        %v612 = vld [vmem:[#allocation2] sm:$0xff]
        %v613 = vld [vmem:[#allocation2 + $0x8] sm:$0xf]
        %s616 = scalar_lea.vmem [#allocation1], 1
        %617 = vst [vmem:[%s616] ss:$2 sm:$0xff] %v612
        %s618 = scalar_lea.vmem [#allocation1], 17
        %619 = vst [vmem:[%s618] ss:$2 sm:$0xff] %v613
        %v620 = vld.sshfl [vmem:[#allocation1] sm:$0xff pattern:$0x75316420]
        %v621 = vld.sshfl [vmem:[#allocation1 + $0x8] sm:$0xff pattern:$0x75316420]
        %v622 = vld.sshfl [vmem:[#allocation1 + $0x10] sm:$0xff pattern:$0x75316420]
        %623 = vrot.lane.b32.xlu0 %v620, 95
        %v624 = vpop.permute.xlu0 %623
        %625 = vrot.lane.b32.xlu0 %v621, 95
        %v626 = vpop.permute.xlu0 %625
        %627 = vrot.lane.b32.xlu0 %v622, 95
        %v628 = vpop.permute.xlu0 %627
        %vm629 = vcmask 777216
        %v630 = vsel %vm629, %v624, %v626
        %v631 = vsel %vm629, %v626, %v628
        %634 = vst [vmem:[#allocation3 + $0x30] sm:$0xf0] %v630
        %635 = vst [vmem:[#allocation3 + $0x38] sm:$0xf0] %v631
        %v636 = vld [vmem:[#allocation2] sm:$0xff]
        %v637 = vld [vmem:[#allocation2 + $0x8] sm:$0xf]
        %640 = vst [vmem:[#allocation1] ss:$2 sm:$0xff] %v636
        %s641 = scalar_lea.vmem [#allocation1], 16
        %642 = vst [vmem:[%s641] ss:$2 sm:$0xff] %v637
        %v643 = vld.sshfl [vmem:[#allocation1] sm:$0xff pattern:$0x75316420]
        %v644 = vld.sshfl [vmem:[#allocation1 + $0x8] sm:$0xff pattern:$0x75316420]
        %v645 = vld.sshfl [vmem:[#allocation1 + $0x10] sm:$0xff pattern:$0x75316420]
        %646 = vrot.lane.b32.xlu0 %v643, 94
        %v647 = vpop.permute.xlu0 %646
        %648 = vrot.lane.b32.xlu0 %v644, 94
        %v649 = vpop.permute.xlu0 %648
        %650 = vrot.lane.b32.xlu0 %v645, 94
        %v651 = vpop.permute.xlu0 %650
        %vm652 = vcmask 769024
        %v653 = vsel %vm652, %v647, %v649
        %v654 = vsel %vm652, %v649, %v651
        %v657 = vsel %vm477, %v653, 0.0
        %v658 = vsel %vm478, %v654, 0.0
        %659 = vst [vmem:[#allocation3 + $0x40] sm:$0xf] %v657
        %660 = vst [vmem:[#allocation3 + $0x48] sm:$0xf] %v658
        %v661 = vld [vmem:[%s1] sm:$0xf]
        %v662 = vld [vmem:[#allocation3] sm:$0xff]
        %v663 = vld [vmem:[#allocation3 + $0x8] sm:$0xff]
        %v664 = vld [vmem:[#allocation3 + $0x10] sm:$0xff]
        %v665 = vld [vmem:[#allocation3 + $0x18] sm:$0xff]
        %v666 = vld [vmem:[#allocation3 + $0x20] sm:$0xff]
        %v667 = vld [vmem:[#allocation3 + $0x28] sm:$0xff]
        %v668 = vld [vmem:[#allocation3 + $0x30] sm:$0xff]
        %v669 = vld [vmem:[#allocation3 + $0x38] sm:$0xff]
        %v670 = vld [vmem:[#allocation3 + $0x40] sm:$0xf]
        %v671 = vld [vmem:[#allocation3 + $0x48] sm:$0xf]
        %v672 = vld [vmem:[%s2] sm:$0xf]
        %674 = vset.pattern.permute.xlu0 0
        %675 = vperm.xlu0 %674, %v672
        %v676 = vpop.permute.xlu0 %675
        %vm678 = vcmask 293888
        %v680 = vsel %vm678, %v661, 0
        %vm682 = vcmask 1043456
        %v684 = vsel %vm682, %v670, 0
        %v687 = vsel %vm682, %v671, 0
        %689 = vmatpush.msra.mxu0 0.0
        %690 = vmatpush.msra.mxu0 0.0
        %691 = vmatpush.msra.mxu0 0.0
        %692 = vmatpush.msra.mxu0 0.0
        %693 = vmatpush.msra.mxu0 0.0
        %694 = vmatpush.msra.mxu0 0.0
        %695 = vmatpush.msra.mxu0 0.0
        %696 = vmatpush.msra.mxu0 0.0
        %697 = vmatpush.msra.mxu0 0.0
        %698 = vmatpush.msra.mxu0 0.0
        %699 = vmatpush.msra.mxu0 0.0
        %700 = vmatpush.msra.mxu0 %v684
        %701 = vmatpush.msra.mxu0 %v668
        %702 = vmatpush.msra.mxu0 %v666
        %703 = vmatpush.msra.mxu0 %v664
        %704 = vmatpush.msra.mxu0 %v662
        %705 = vmatmul.f32.gmra.mxu0 %v680
        %v706 = vpop.f32.mrf.mxu0
        %v707 = vadd.f32 %v676, %v706
        %708 = vdwg.mxu0
        %709 = vmatpush.msra.mxu0 0.0
        %710 = vmatpush.msra.mxu0 0.0
        %711 = vmatpush.msra.mxu0 0.0
        %712 = vmatpush.msra.mxu0 0.0
        %713 = vmatpush.msra.mxu0 0.0
        %714 = vmatpush.msra.mxu0 0.0
        %715 = vmatpush.msra.mxu0 0.0
        %716 = vmatpush.msra.mxu0 0.0
        %717 = vmatpush.msra.mxu0 0.0
        %718 = vmatpush.msra.mxu0 0.0
        %719 = vmatpush.msra.mxu0 0.0
        %720 = vmatpush.msra.mxu0 %v687
        %721 = vmatpush.msra.mxu0 %v669
        %722 = vmatpush.msra.mxu0 %v667
        %723 = vmatpush.msra.mxu0 %v665
        %724 = vmatpush.msra.mxu0 %v663
        %725 = vmatmul.f32.gmra.mxu0 %v680
        %v726 = vpop.f32.mrf.mxu0
        %v727 = vadd.f32 %v676, %v726
        %728 = vdwg.mxu0
        %v729 = vmax.f32 %v707, 0.0
        %v730 = vmax.f32 %v727, 0.0
        %v733 = vrot.slane %v730, 4
        %v734 = vsel %vm682, %v729, %v733
        %735 = vrot.lane.b32.xlu0 %v734, 17
        %v736 = vpop.permute.xlu0 %735
        %v737 = vrot.slane %v736, 4
        %v738 = vsel %vm424, %v737, %v736
        %741 = vst.msk [vmem:[#allocation2] sm:$0xff] %vm430, %v738
        %742 = vst.msk [vmem:[#allocation2 + $0x8] sm:$0xf] %vm432, %v737
        %v743 = vld [vmem:[#allocation2] sm:$0xff]
        %745 = vst [vmem:[#allocation1] ss:$2 sm:$0xff] %v743
        %v746 = vld.sshfl [vmem:[#allocation1] sm:$0xff pattern:$0x75316420]
        %v747 = vld.sshfl [vmem:[#allocation1 + $0x8] sm:$0xff pattern:$0x75316420]
        %v750 = vsel %vm437, %v746, 0.0
        %v751 = vsel %vm438, %v747, 0.0
        %752 = vst [vmem:[#allocation3] sm:$0xf] %v750
        %753 = vst [vmem:[#allocation3 + $0x8] sm:$0xf] %v751
        %v754 = vld [vmem:[#allocation2] sm:$0xff]
        %v755 = vld [vmem:[#allocation2 + $0x8] sm:$0xf]
        %s758 = scalar_lea.vmem [#allocation1], 1
        %759 = vst [vmem:[%s758] ss:$2 sm:$0xff] %v754
        %s760 = scalar_lea.vmem [#allocation1], 17
        %761 = vst [vmem:[%s760] ss:$2 sm:$0xff] %v755
        %v762 = vld.sshfl [vmem:[#allocation1] sm:$0xff pattern:$0x75316420]
        %v763 = vld.sshfl [vmem:[#allocation1 + $0x8] sm:$0xff pattern:$0x75316420]
        %v764 = vld.sshfl [vmem:[#allocation1 + $0x10] sm:$0xff pattern:$0x75316420]
        %765 = vrot.lane.b32.xlu0 %v762, 127
        %v766 = vpop.permute.xlu0 %765
        %767 = vrot.lane.b32.xlu0 %v763, 127
        %v768 = vpop.permute.xlu0 %767
        %769 = vrot.lane.b32.xlu0 %v764, 127
        %v770 = vpop.permute.xlu0 %769
        %v771 = vsel %vm466, %v766, %v768
        %v772 = vsel %vm466, %v768, %v770
        %775 = vst [vmem:[#allocation3] sm:$0xf0] %v771
        %776 = vst [vmem:[#allocation3 + $0x8] sm:$0xf0] %v772
        %v777 = vld [vmem:[#allocation2] sm:$0xff]
        %v778 = vld [vmem:[#allocation2 + $0x8] sm:$0xf]
        %781 = vst [vmem:[#allocation1] ss:$2 sm:$0xff] %v777
        %s782 = scalar_lea.vmem [#allocation1], 16
        %783 = vst [vmem:[%s782] ss:$2 sm:$0xff] %v778
        %v784 = vld.sshfl [vmem:[#allocation1] sm:$0xff pattern:$0x75316420]
        %v785 = vld.sshfl [vmem:[#allocation1 + $0x8] sm:$0xff pattern:$0x75316420]
        %v786 = vld.sshfl [vmem:[#allocation1 + $0x10] sm:$0xff pattern:$0x75316420]
        %787 = vrot.lane.b32.xlu0 %v784, 126
        %v788 = vpop.permute.xlu0 %787
        %789 = vrot.lane.b32.xlu0 %v785, 126
        %v790 = vpop.permute.xlu0 %789
        %791 = vrot.lane.b32.xlu0 %v786, 126
        %v792 = vpop.permute.xlu0 %791
        %v793 = vsel %vm493, %v788, %v790
        %v794 = vsel %vm493, %v790, %v792
        %v797 = vsel %vm477, %v793, 0.0
        %v798 = vsel %vm478, %v794, 0.0
        %799 = vst [vmem:[#allocation3 + $0x10] sm:$0xf] %v797
        %800 = vst [vmem:[#allocation3 + $0x18] sm:$0xf] %v798
        %v801 = vld [vmem:[#allocation2] sm:$0xff]
        %v802 = vld [vmem:[#allocation2 + $0x8] sm:$0xf]
        %805 = vst [vmem:[#allocation1] ss:$2 sm:$0xff] %v801
        %s806 = scalar_lea.vmem [#allocation1], 16
        %807 = vst [vmem:[%s806] ss:$2 sm:$0xff] %v802
        %v808 = vld.sshfl [vmem:[#allocation1] sm:$0xff pattern:$0x75316420]
        %v809 = vld.sshfl [vmem:[#allocation1 + $0x8] sm:$0xff pattern:$0x75316420]
        %v810 = vld.sshfl [vmem:[#allocation1 + $0x10] sm:$0xff pattern:$0x75316420]
        %811 = vrot.lane.b32.xlu0 %v808, 112
        %v812 = vpop.permute.xlu0 %811
        %813 = vrot.lane.b32.xlu0 %v809, 112
        %v814 = vpop.permute.xlu0 %813
        %815 = vrot.lane.b32.xlu0 %v810, 112
        %v816 = vpop.permute.xlu0 %815
        %v817 = vsel %vm518, %v812, %v814
        %v818 = vsel %vm518, %v814, %v816
        %v821 = vsel %vm437, %v817, 0.0
        %v822 = vsel %vm438, %v818, 0.0
        %v825 = vrot.slane %v821, 4
        %v826 = vrot.slane %v822, 4
        %829 = vst [vmem:[#allocation3 + $0x10] sm:$0xf0] %v825
        %830 = vst [vmem:[#allocation3 + $0x18] sm:$0xf0] %v826
        %v831 = vld [vmem:[#allocation2] sm:$0xff]
        %v832 = vld [vmem:[#allocation2 + $0x8] sm:$0xf]
        %835 = vst [vmem:[#allocation1] ss:$2 sm:$0xff] %v831
        %s836 = scalar_lea.vmem [#allocation1], 16
        %837 = vst [vmem:[%s836] ss:$2 sm:$0xff] %v832
        %v838 = vld.sshfl [vmem:[#allocation1] sm:$0xff pattern:$0x75316420]
        %v839 = vld.sshfl [vmem:[#allocation1 + $0x8] sm:$0xff pattern:$0x75316420]
        %v840 = vld.sshfl [vmem:[#allocation1 + $0x10] sm:$0xff pattern:$0x75316420]
        %841 = vrot.lane.b32.xlu0 %v838, 111
        %v842 = vpop.permute.xlu0 %841
        %843 = vrot.lane.b32.xlu0 %v839, 111
        %v844 = vpop.permute.xlu0 %843
        %845 = vrot.lane.b32.xlu0 %v840, 111
        %v846 = vpop.permute.xlu0 %845
        %v847 = vsel %vm549, %v842, %v844
        %v848 = vsel %vm549, %v844, %v846
        %851 = vst [vmem:[#allocation3 + $0x20] sm:$0xf] %v847
        %852 = vst [vmem:[#allocation3 + $0x28] sm:$0xf] %v848
        %v853 = vld [vmem:[#allocation2] sm:$0xff]
        %v854 = vld [vmem:[#allocation2 + $0x8] sm:$0xf]
        %857 = vst [vmem:[#allocation1] ss:$2 sm:$0xff] %v853
        %s858 = scalar_lea.vmem [#allocation1], 16
        %859 = vst [vmem:[%s858] ss:$2 sm:$0xff] %v854
        %v860 = vld.sshfl [vmem:[#allocation1] sm:$0xff pattern:$0x75316420]
        %v861 = vld.sshfl [vmem:[#allocation1 + $0x8] sm:$0xff pattern:$0x75316420]
        %v862 = vld.sshfl [vmem:[#allocation1 + $0x10] sm:$0xff pattern:$0x75316420]
        %863 = vrot.lane.b32.xlu0 %v860, 110
        %v864 = vpop.permute.xlu0 %863
        %865 = vrot.lane.b32.xlu0 %v861, 110
        %v866 = vpop.permute.xlu0 %865
        %867 = vrot.lane.b32.xlu0 %v862, 110
        %v868 = vpop.permute.xlu0 %867
        %v869 = vsel %vm572, %v864, %v866
        %v870 = vsel %vm572, %v866, %v868
        %v873 = vsel %vm477, %v869, 0.0
        %v874 = vsel %vm478, %v870, 0.0
        %v877 = vrot.slane %v873, 4
        %v878 = vrot.slane %v874, 4
        %881 = vst [vmem:[#allocation3 + $0x20] sm:$0xf0] %v877
        %882 = vst [vmem:[#allocation3 + $0x28] sm:$0xf0] %v878
        %v883 = vld [vmem:[#allocation2] sm:$0xff]
        %v884 = vld [vmem:[#allocation2 + $0x8] sm:$0xf]
        %887 = vst [vmem:[#allocation1] ss:$2 sm:$0xff] %v883
        %s888 = scalar_lea.vmem [#allocation1], 16
        %889 = vst [vmem:[%s888] ss:$2 sm:$0xff] %v884
        %v890 = vld.sshfl [vmem:[#allocation1] sm:$0xff pattern:$0x75316420]
        %v891 = vld.sshfl [vmem:[#allocation1 + $0x8] sm:$0xff pattern:$0x75316420]
        %v892 = vld.sshfl [vmem:[#allocation1 + $0x10] sm:$0xff pattern:$0x75316420]
        %893 = vrot.lane.b32.xlu0 %v890, 96
        %v894 = vpop.permute.xlu0 %893
        %895 = vrot.lane.b32.xlu0 %v891, 96
        %v896 = vpop.permute.xlu0 %895
        %897 = vrot.lane.b32.xlu0 %v892, 96
        %v898 = vpop.permute.xlu0 %897
        %v899 = vsel %vm603, %v894, %v896
        %v900 = vsel %vm603, %v896, %v898
        %v903 = vsel %vm437, %v899, 0.0
        %v904 = vsel %vm438, %v900, 0.0
        %905 = vst [vmem:[#allocation3 + $0x30] sm:$0xf] %v903
        %906 = vst [vmem:[#allocation3 + $0x38] sm:$0xf] %v904
        %v907 = vld [vmem:[#allocation2] sm:$0xff]
        %v908 = vld [vmem:[#allocation2 + $0x8] sm:$0xf]
        %s911 = scalar_lea.vmem [#allocation1], 1
        %912 = vst [vmem:[%s911] ss:$2 sm:$0xff] %v907
        %s913 = scalar_lea.vmem [#allocation1], 17
        %914 = vst [vmem:[%s913] ss:$2 sm:$0xff] %v908
        %v915 = vld.sshfl [vmem:[#allocation1] sm:$0xff pattern:$0x75316420]
        %v916 = vld.sshfl [vmem:[#allocation1 + $0x8] sm:$0xff pattern:$0x75316420]
        %v917 = vld.sshfl [vmem:[#allocation1 + $0x10] sm:$0xff pattern:$0x75316420]
        %918 = vrot.lane.b32.xlu0 %v915, 95
        %v919 = vpop.permute.xlu0 %918
        %920 = vrot.lane.b32.xlu0 %v916, 95
        %v921 = vpop.permute.xlu0 %920
        %922 = vrot.lane.b32.xlu0 %v917, 95
        %v923 = vpop.permute.xlu0 %922
        %v924 = vsel %vm629, %v919, %v921
        %v925 = vsel %vm629, %v921, %v923
        %928 = vst [vmem:[#allocation3 + $0x30] sm:$0xf0] %v924
        %929 = vst [vmem:[#allocation3 + $0x38] sm:$0xf0] %v925
        %v930 = vld [vmem:[#allocation2] sm:$0xff]
        %v931 = vld [vmem:[#allocation2 + $0x8] sm:$0xf]
        %934 = vst [vmem:[#allocation1] ss:$2 sm:$0xff] %v930
        %s935 = scalar_lea.vmem [#allocation1], 16
        %936 = vst [vmem:[%s935] ss:$2 sm:$0xff] %v931
        %v937 = vld.sshfl [vmem:[#allocation1] sm:$0xff pattern:$0x75316420]
        %v938 = vld.sshfl [vmem:[#allocation1 + $0x8] sm:$0xff pattern:$0x75316420]
        %v939 = vld.sshfl [vmem:[#allocation1 + $0x10] sm:$0xff pattern:$0x75316420]
        %940 = vrot.lane.b32.xlu0 %v937, 94
        %v941 = vpop.permute.xlu0 %940
        %942 = vrot.lane.b32.xlu0 %v938, 94
        %v943 = vpop.permute.xlu0 %942
        %944 = vrot.lane.b32.xlu0 %v939, 94
        %v945 = vpop.permute.xlu0 %944
        %v946 = vsel %vm652, %v941, %v943
        %v947 = vsel %vm652, %v943, %v945
        %v950 = vsel %vm477, %v946, 0.0
        %v951 = vsel %vm478, %v947, 0.0
        %952 = vst [vmem:[#allocation3 + $0x40] sm:$0xf] %v950
        %953 = vst [vmem:[#allocation3 + $0x48] sm:$0xf] %v951
        %v954 = vld [vmem:[%s3] sm:$0xf]
        %v955 = vld [vmem:[#allocation3] sm:$0xff]
        %v956 = vld [vmem:[#allocation3 + $0x8] sm:$0xff]
        %v957 = vld [vmem:[#allocation3 + $0x10] sm:$0xff]
        %v958 = vld [vmem:[#allocation3 + $0x18] sm:$0xff]
        %v959 = vld [vmem:[#allocation3 + $0x20] sm:$0xff]
        %v960 = vld [vmem:[#allocation3 + $0x28] sm:$0xff]
        %v961 = vld [vmem:[#allocation3 + $0x30] sm:$0xff]
        %v962 = vld [vmem:[#allocation3 + $0x38] sm:$0xff]
        %v963 = vld [vmem:[#allocation3 + $0x40] sm:$0xf]
        %v964 = vld [vmem:[#allocation3 + $0x48] sm:$0xf]
        %v965 = vld [vmem:[%s4] sm:$0xf]
        %967 = vset.pattern.permute.xlu0 0
        %968 = vperm.xlu0 %967, %v965
        %v969 = vpop.permute.xlu0 %968
        %v972 = vsel %vm678, %v954, 0
        %v975 = vsel %vm682, %v963, 0
        %v978 = vsel %vm682, %v964, 0
        %980 = vmatpush.msra.mxu0 0.0
        %981 = vmatpush.msra.mxu0 0.0
        %982 = vmatpush.msra.mxu0 0.0
        %983 = vmatpush.msra.mxu0 0.0
        %984 = vmatpush.msra.mxu0 0.0
        %985 = vmatpush.msra.mxu0 0.0
        %986 = vmatpush.msra.mxu0 0.0
        %987 = vmatpush.msra.mxu0 0.0
        %988 = vmatpush.msra.mxu0 0.0
        %989 = vmatpush.msra.mxu0 0.0
        %990 = vmatpush.msra.mxu0 0.0
        %991 = vmatpush.msra.mxu0 %v975
        %992 = vmatpush.msra.mxu0 %v961
        %993 = vmatpush.msra.mxu0 %v959
        %994 = vmatpush.msra.mxu0 %v957
        %995 = vmatpush.msra.mxu0 %v955
        %996 = vmatmul.f32.gmra.mxu0 %v972
        %v997 = vpop.f32.mrf.mxu0
        %v998 = vadd.f32 %v969, %v997
        %999 = vdwg.mxu0
        %1000 = vmatpush.msra.mxu0 0.0
        %1001 = vmatpush.msra.mxu0 0.0
        %1002 = vmatpush.msra.mxu0 0.0
        %1003 = vmatpush.msra.mxu0 0.0
        %1004 = vmatpush.msra.mxu0 0.0
        %1005 = vmatpush.msra.mxu0 0.0
        %1006 = vmatpush.msra.mxu0 0.0
        %1007 = vmatpush.msra.mxu0 0.0
        %1008 = vmatpush.msra.mxu0 0.0
        %1009 = vmatpush.msra.mxu0 0.0
        %1010 = vmatpush.msra.mxu0 0.0
        %1011 = vmatpush.msra.mxu0 %v978
        %1012 = vmatpush.msra.mxu0 %v962
        %1013 = vmatpush.msra.mxu0 %v960
        %1014 = vmatpush.msra.mxu0 %v958
        %1015 = vmatpush.msra.mxu0 %v956
        %1016 = vmatmul.f32.gmra.mxu0 %v972
        %v1017 = vpop.f32.mrf.mxu0
        %v1018 = vadd.f32 %v969, %v1017
        %1019 = vdwg.mxu0
        %v1020 = vsel %vm682, %v998, 0.0
        %v1021 = vsel %vm682, %v1018, 0.0
        %v1022 = vadd.f32 %v1020, %v1021
        %1023 = vadd.xlane.f32.xlu0 %v1022
        %v1024 = vpop.xlane.xlu0 %1023
        %v1025 = vrcp.pop 256.0
        %v1026 = vmul.f32 256.0, %v1025
        %v1027 = vsub.f32 1.0, %v1026
        %v1028 = vmul.f32 %v1025, %v1027
        %v1029 = vadd.f32 %v1025, %v1028
        %vm1030 = vweird.f32 %v1025
        %v1031 = vsel %vm1030, %v1025, %v1029
        %v1032 = vmul.f32 %v1024, %v1031
        %v1033 = vld [vmem:[%s5] sm:$0xff]
        %v1034 = vld [vmem:[%s5 + $0x8] sm:$0xff]
        %v1035 = vld [vmem:[%s5 + $0x10] sm:$0xff]
        %v1036 = vld [vmem:[%s5 + $0x18] sm:$0xff]
        %v1037 = vld [vmem:[%s6] sm:$0xff]
        %v1038 = vld [vmem:[%s6 + $0x8] sm:$0xff]
        %v1039 = vld [vmem:[%s6 + $0x10] sm:$0xff]
        %v1040 = vld [vmem:[%s6 + $0x18] sm:$0xff]
        %vm1041 = vcmask 31744
        %v1043 = vsel %vm1041, %v1033, 0
        %v1046 = vsel %vm1041, %v1034, 0
        %v1049 = vsel %vm1041, %v1035, 0
        %v1052 = vsel %vm1041, %v1036, 0
        %v1055 = vsel %vm682, %v1032, 0
        %1057 = vmatpush.msra.mxu0 0.0
        %1058 = vmatpush.msra.mxu0 0.0
        %1059 = vmatpush.msra.mxu0 0.0
        %1060 = vmatpush.msra.mxu0 0.0
        %1061 = vmatpush.msra.mxu0 0.0
        %1062 = vmatpush.msra.mxu0 0.0
        %1063 = vmatpush.msra.mxu0 0.0
        %1064 = vmatpush.msra.mxu0 0.0
        %1065 = vmatpush.msra.mxu0 0.0
        %1066 = vmatpush.msra.mxu0 0.0
        %1067 = vmatpush.msra.mxu0 0.0
        %1068 = vmatpush.msra.mxu0 0.0
        %1069 = vmatpush.msra.mxu0 0.0
        %1070 = vmatpush.msra.mxu0 0.0
        %1071 = vmatpush.msra.mxu0 0.0
        %1072 = vmatpush.msra.mxu0 %v1055
        %1073 = vmatmul.f32.gmra.mxu0 %v1043
        %v1074 = vpop.f32.mrf.mxu0
        %v1075 = vadd.f32 %v1037, %v1074
        %1076 = vmatmul.f32.gmra.mxu0 %v1046
        %v1077 = vpop.f32.mrf.mxu0
        %v1078 = vadd.f32 %v1038, %v1077
        %1079 = vmatmul.f32.gmra.mxu0 %v1049
        %v1080 = vpop.f32.mrf.mxu0
        %v1081 = vadd.f32 %v1039, %v1080
        %1082 = vmatmul.f32.gmra.mxu0 %v1052
        %v1083 = vpop.f32.mrf.mxu0
        %v1084 = vadd.f32 %v1040, %v1083
        %1085 = vdwg.mxu0
        %v1086 = vmax.f32 %v1075, 0.0
        %v1087 = vmax.f32 %v1078, 0.0
        %v1088 = vmax.f32 %v1081, 0.0
        %v1089 = vmax.f32 %v1084, 0.0
        %v1090 = vld [vmem:[%s7] sm:$0xf]
        %v1091 = vld [vmem:[%s8] sm:$0xf]
        %vm1092 = vcmask 261120
        %v1094 = vsel %vm1092, %v1090, 0
        %1096 = vmatpush.msra.mxu0 0.0
        %1097 = vmatpush.msra.mxu0 0.0
        %1098 = vmatpush.msra.mxu0 0.0
        %1099 = vmatpush.msra.mxu0 0.0
        %1100 = vmatpush.msra.mxu0 0.0
        %1101 = vmatpush.msra.mxu0 0.0
        %1102 = vmatpush.msra.mxu0 0.0
        %1103 = vmatpush.msra.mxu0 0.0
        %1104 = vmatpush.msra.mxu0 0.0
        %1105 = vmatpush.msra.mxu0 0.0
        %1106 = vmatpush.msra.mxu0 0.0
        %1107 = vmatpush.msra.mxu0 0.0
        %1108 = vmatpush.msra.mxu0 %v1089
        %1109 = vmatpush.msra.mxu0 %v1088
        %1110 = vmatpush.msra.mxu0 %v1087
        %1111 = vmatpush.msra.mxu0 %v1086
        %1112 = vmatmul.f32.gmra.mxu0 %v1094
        %v1113 = vpop.f32.mrf.mxu0
        %v1114 = vadd.f32 %v1091, %v1113
        %1115 = vdwg.mxu0
        %v1116 = vxor.u32 %v1114, 2147483648
        %v1117 = vmul.f32 %v1116, 1.442695
        %v1118 = vpow.pop %v1117
        %v1119 = vadd.f32 %v1118, 1.0
        %v1120 = vrcp.pop %v1119
        %v1121 = vmul.f32 %v1119, %v1120
        %v1122 = vsub.f32 1.0, %v1121
        %v1123 = vmul.f32 %v1120, %v1122
        %v1124 = vadd.f32 %v1120, %v1123
        %vm1125 = vweird.f32 %v1119
        %vm1126 = vweird.f32 %v1120
        %vm1127 = vmor %vm1125, %vm1126
        %v1128 = vsel %vm1127, %v1120, %v1124
        %v1129 = vand.u32 2147483647, %v1119
        %vm1130 = vcmp.eq.f32.partialorder %v1129, 8.507059e+37
        %v1131 = vand.u32 %v1119, 2147483648
        %v1132 = vor.u32 1.1754944e-38, %v1131
        %v1133 = vsel %vm1130, %v1132, %v1128
        %v1134 = vmul.f32 1.0, %v1133
        %v1135 = vld [vmem:[%s9] sm:$0xf]
        %v1136 = vld [vmem:[%s10] sm:$0xf]
        %v1138 = vsel %vm1092, %v1135, 0
        %1140 = vmatpush.msra.mxu0 0.0
        %1141 = vmatpush.msra.mxu0 0.0
        %1142 = vmatpush.msra.mxu0 0.0
        %1143 = vmatpush.msra.mxu0 0.0
        %1144 = vmatpush.msra.mxu0 0.0
        %1145 = vmatpush.msra.mxu0 0.0
        %1146 = vmatpush.msra.mxu0 0.0
        %1147 = vmatpush.msra.mxu0 0.0
        %1148 = vmatpush.msra.mxu0 0.0
        %1149 = vmatpush.msra.mxu0 0.0
        %1150 = vmatpush.msra.mxu0 0.0
        %1151 = vmatpush.msra.mxu0 0.0
        %1152 = vmatpush.msra.mxu0 %v1089
        %1153 = vmatpush.msra.mxu0 %v1088
        %1154 = vmatpush.msra.mxu0 %v1087
        %1155 = vmatpush.msra.mxu0 %v1086
        %1156 = vmatmul.f32.gmra.mxu0 %v1138
        %v1157 = vpop.f32.mrf.mxu0
        %v1158 = vadd.f32 %v1136, %v1157
        %1159 = vdwg.mxu0
        %1161 = vset.pattern.permute.xlu0 0
        %1162 = vperm.xlu0 %1161, %v1134
        %v1163 = vpop.permute.xlu0 %1162
        %v1165 = vmul.f32 %v1163, %v998
        %v1166 = vmul.f32 %v1163, %v1018
        %v1169 = vrot.slane %v1166, 4
        %v1170 = vsel %vm682, %v1165, %v1169
        %v1172 = vadd.f32 %v419, %v1170
        %1174 = vset.pattern.permute.xlu0 0
        %1175 = vperm.xlu0 %1174, %v1158
        %v1176 = vpop.permute.xlu0 %1175
        %v1178 = vunpack.c.l.s4 839922192
        %v1179 = vunpack.c.0.s8 %v1178
        %v1180 = vperm.slane %v1176, %v1179
        %v1182 = vadd.f32 %v1172, %v1180
        %v1183 = vmax.f32 %v1182, 0.0
        %1184 = vst [vmem:[%s379] sm:$0xff] %v1183
        %s1185 = sand.u32 %s269, 1
        %s1186 = scalar_lea.sflag [#allocation5], %s1185
        %s1187 = sand.u32 %s269, 1
        %s1188 = smul.addr %s1187, 8
        %s1189 = scalar_lea.vmem [#allocation4], %s1188
        // Predicated region
        $region65: #{tpu_custom_call.1} parent=63 // pred_check
          %p1190 = pneg %p279
        $region66: #{tpu_custom_call.1} parent=63 // pred_check_branch
          %1192 = sbr.rel (%p1190) target = $region68
        $region67: #{tpu_custom_call.1} parent=63 // pred_region
          %1194 = vsyncadd %s1186, 0
          %s1195 = smul.addr %s25, 2
          %s1196 = smul.addr %s1195, 4
          %s1197 = scalar_lea.hbm %s11, %s1196
          %s1199 = sshll.u32 %s1189, 4
          %s1200 = int_to_ptr.vmem [resolvable:$true] %s1199
          %s1201 = sshll.u32 %s1197, 4
          %s1202 = int_to_ptr.hbm [resolvable:$true] %s1201
          %1204 = dma.vmem_to_hbm [thread:$0]  %s1200, 128, %s1202, %s1186
        $region68: #{tpu_custom_call.1} parent=63 // pred_fallthru
          _
      $region64: #{tpu_custom_call.1} parent=5 // pred_fallthru
        _
      %p1205 = scmp.le.s32.totalorder 2, %s20
      // Predicated region
      $region69: #{tpu_custom_call.1} parent=5 // pred_check
        %p1206 = pneg %p1205
      $region70: #{tpu_custom_call.1} parent=5 // pred_check_branch
        %1208 = sbr.rel (%p1206) target = $region72
      $region71: #{tpu_custom_call.1} parent=5 // pred_region
        %s1209 = ssub.s32 %s20, 2
        // Predicated region
        $region73: #{tpu_custom_call.1} parent=71 // pred_check
          %p1210 = pneg %p285
        $region74: #{tpu_custom_call.1} parent=71 // pred_check_branch
          %1212 = sbr.rel (%p1210) target = $region76
        $region75: #{tpu_custom_call.1} parent=71 // pred_region
          %s1213 = sand.u32 %s270, 1
          %s1214 = scalar_lea.sflag [#allocation5], %s1213
          %s1215 = sand.u32 %s270, 1
          %s1216 = smul.addr %s1215, 8
          %s1217 = scalar_lea.vmem [#allocation4], %s1216
          %1219 = dma.done %s1214, 128
        $region76: #{tpu_custom_call.1} parent=71 // pred_fallthru
          _
      $region72: #{tpu_custom_call.1} parent=5 // pred_fallthru
        _
    $region6: #{tpu_custom_call.1} parent=1 // loop_footer
      %s24 = sadd.s32 1, %s20
    $region7: #{tpu_custom_call.1} parent=1 // loop_footer_branch
      %19 = sbr.rel target = $region3
    $region8: #{tpu_custom_call.1} parent=1 // loop_exit
      _
    %1220 = vsyncpa [#allocation5], 1
    %s1221 = scalar_lea.sflag [#allocation5], 1
    %1222 = vsyncpa %s1221, 1

</llo_original>
